<compile_context>
chip_gen: v5e
topology: v5e:2x2
jax: 0.10.0
libtpu: 0.0.40
codegen_flags: <defaults>
</compile_context>

<pallas_src>
import math

import jax
import jax.numpy as jnp
from jax.experimental import pallas as pl
from jax.experimental.pallas import tpu as pltpu  # noqa: F401  (imported per template)

# ---- hyperparameters (small, consistent with the module's __init__) ----
VOCAB = 50          # input_dim
HID_DIM = 32        # hid_dim
N_HEADS = 4         # n_heads
PF_DIM = 64         # pf_dim
N_LAYERS = 2        # n_layers
MAX_LEN = 100       # max_length
LN_EPS = 1e-5       # nn.LayerNorm default eps
B, S = 2, 8         # batch, seq


def _layer_norm(x, g, b):
    mu = jnp.mean(x, axis=-1, keepdims=True)
    var = jnp.mean((x - mu) ** 2, axis=-1, keepdims=True)
    return (x - mu) * jax.lax.rsqrt(var + LN_EPS) * g + b


def encoder_kernel(x_ref, mb_ref, wqkv_ref, wo_ref, w1_ref, w2_ref,
                   bias_ref, out_ref):
    n_rows, h = x_ref.shape              # (B*S, H)
    hd = h // N_HEADS
    pf = w1_ref.shape[2]
    n_layers = wqkv_ref.shape[0]

    x2 = x_ref[...]                      # (B*S, H) f32, resident activation
    mbias = mb_ref[...]                  # (B*S, B*S) additive mask (0 / -1e10)

    for l in range(n_layers):            # static unroll over layers
        wqkv = wqkv_ref[l]               # (H, 3H)   (Q part pre-scaled by 1/sqrt(hd))
        wo = wo_ref[l]                   # (H, H)
        w1 = w1_ref[l]                   # (H, P)
        w2 = w2_ref[l]                   # (P, H)
        bz = bias_ref[l]                 # (8, 128) packed small tensors
        bqkv = bz[0:1, :3 * h]
        bo   = bz[1:2, :h]
        g1   = bz[2:3, :h]
        be1  = bz[3:4, :h]
        b1   = bz[4:5, :pf]
        b2   = bz[5:6, :h]
        g2   = bz[6:7, :h]
        be2  = bz[7:8, :h]

        # ---- fused Q/K/V projection: one (B*S, H) @ (H, 3H) matmul ----
        qkv = jnp.dot(x2, wqkv, preferred_element_type=jnp.float32) + bqkv

        # ---- per-head attention over the full flattened (B*S) block.
        # Cross-batch / padded keys are killed by the additive mask bias.
        # Each head's context is immediately folded into the output
        # projection (block-matmul identity), so no concat / scratch stores.
        attn = None
        for hi in range(N_HEADS):        # static unroll (n_heads = 4)
            c0 = hi * hd
            qh = qkv[:, c0:c0 + hd]                               # (BS, hd)
            kh = qkv[:, h + c0:h + c0 + hd]                       # (BS, hd)
            vh = qkv[:, 2 * h + c0:2 * h + c0 + hd]               # (BS, hd)
            # energy = (Q/sqrt(hd)) K^T  (scaling folded into wq host-side)
            e = jax.lax.dot_general(
                qh, kh, (((1,), (1,)), ((), ())),
                preferred_element_type=jnp.float32)               # (BS, BS)
            e = e + mbias                                         # additive mask
            # stable softmax over keys (reciprocal on the EUP)
            e = e - jnp.max(e, axis=-1, keepdims=True)
            p = jnp.exp(e)
            p = p * pl.reciprocal(jnp.sum(p, axis=-1, keepdims=True),
                                  approx=True)
            ctx_h = jnp.dot(p, vh, preferred_element_type=jnp.float32)  # (BS, hd)
            part = jnp.dot(ctx_h, wo[c0:c0 + hd, :],
                           preferred_element_type=jnp.float32)          # (BS, H)
            attn = part if attn is None else attn + part
        attn = attn + bo
        x2 = _layer_norm(x2 + attn, g1, be1)

        # ---- position-wise feed-forward ----
        ff = jnp.maximum(
            jnp.dot(x2, w1, preferred_element_type=jnp.float32) + b1, 0.0)
        ff = jnp.dot(ff, w2, preferred_element_type=jnp.float32) + b2
        x2 = _layer_norm(x2 + ff, g2, be2)

    out_ref[...] = x2                    # single full-block store


def encoder_forward(src_tokens, src_mask, params):
    bsz, slen = src_tokens.shape
    h = HID_DIM
    hd = h // N_HEADS

    # Embedding glue (gathers) in plain JAX; dropout is identity at eval.
    # TODO(synk): dropout layers are eval-mode identity (no PRNG path needed).
    tok = jnp.take(params['tok_emb'], src_tokens, axis=0)       # (B, S, H)
    pos = params['pos_emb'][:slen][None, :, :]                  # (1, S, H)
    x2 = (tok * jnp.float32(math.sqrt(h)) + pos).reshape(bsz * slen, h)

    # Block-diagonal additive mask over the flattened (B*S) rows:
    # 0 where (same batch AND key valid), -1e10 otherwise (cross-batch or pad).
    batch_ids = jnp.repeat(jnp.arange(bsz), slen)               # (BS,)
    same_batch = batch_ids[:, None] == batch_ids[None, :]       # (BS, BS)
    key_valid = (src_mask.reshape(-1) != 0)[None, :]            # (1, BS)
    mask_bias = jnp.where(same_batch & key_valid, 0.0, -1e10).astype(jnp.float32)

    # Fuse Q/K/V, folding the 1/sqrt(head_dim) attention scale into Q.
    inv_scale = jnp.float32(1.0 / math.sqrt(hd))
    wqkv = jnp.concatenate(
        [params['wq'] * inv_scale, params['wk'], params['wv']], axis=-1)  # (L, H, 3H)
    bqkv = jnp.concatenate(
        [params['bq'] * inv_scale, params['bk'], params['bv']], axis=-1)  # (L, 1, 3H)

    # Pack all tiny per-layer vectors into one (L, 8, 128) array (one DMA).
    def pad_row(a):
        return jnp.pad(a, ((0, 0), (0, 0), (0, 128 - a.shape[-1])))

    biases = jnp.concatenate(
        [pad_row(bqkv), pad_row(params['bo']), pad_row(params['g1']),
         pad_row(params['be1']), pad_row(params['b1']), pad_row(params['b2']),
         pad_row(params['g2']), pad_row(params['be2'])], axis=1)  # (L, 8, 128)

    # Single kernel invocation: whole (tiny) working set lives in VMEM,
    # layer loop runs inside the kernel (no grid / pipeline overhead).
    out2 = pl.pallas_call(
        encoder_kernel,
        out_shape=jax.ShapeDtypeStruct((bsz * slen, h), jnp.float32),
    )(x2, mask_bias, wqkv, params['wo'], params['w1'], params['w2'], biases)

    return out2.reshape(bsz, slen, h)


# ---- pure-JAX reference for correctness check ----
def encoder_reference(src_tokens, src_mask, params):
    bsz, slen = src_tokens.shape
    h = HID_DIM
    hd = h // N_HEADS
    x = (jnp.take(params['tok_emb'], src_tokens, axis=0) * math.sqrt(h)
         + params['pos_emb'][:slen][None])
    mask = src_mask.astype(jnp.float32)
    for l in range(N_LAYERS):
        q = x @ params['wq'][l] + params['bq'][l]
        k = x @ params['wk'][l] + params['bk'][l]
        v = x @ params['wv'][l] + params['bv'][l]
        q = q.reshape(bsz, slen, N_HEADS, hd).transpose(0, 2, 1, 3)
        k = k.reshape(bsz, slen, N_HEADS, hd).transpose(0, 2, 1, 3)
        v = v.reshape(bsz, slen, N_HEADS, hd).transpose(0, 2, 1, 3)
        e = jnp.einsum('bhqd,bhkd->bhqk', q, k) / math.sqrt(hd)
        e = jnp.where(mask[:, None, None, :] == 0, -1e10, e)
        a = jax.nn.softmax(e, axis=-1)
        ctx = jnp.einsum('bhqk,bhkd->bhqd', a, v).transpose(0, 2, 1, 3)
        ctx = ctx.reshape(bsz, slen, h)
        attn_out = ctx @ params['wo'][l] + params['bo'][l]
        x = _layer_norm(x + attn_out, params['g1'][l], params['be1'][l])
        ff = jax.nn.relu(x @ params['w1'][l] + params['b1'][l])
        ff = ff @ params['w2'][l] + params['b2'][l]
        x = _layer_norm(x + ff, params['g2'][l], params['be2'][l])
    return x


def init_params(key):
    keys = jax.random.split(key, 16)

    def nrm(k, shape, scale=0.05):
        return jax.random.normal(k, shape, dtype=jnp.float32) * scale

    L, H, P = N_LAYERS, HID_DIM, PF_DIM
    return dict(
        tok_emb=nrm(keys[0], (VOCAB, H), 0.1),
        pos_emb=nrm(keys[1], (MAX_LEN, H), 0.1),
        wq=nrm(keys[2], (L, H, H)), bq=nrm(keys[3], (L, 1, H)),
        wk=nrm(keys[4], (L, H, H)), bk=nrm(keys[5], (L, 1, H)),
        wv=nrm(keys[6], (L, H, H)), bv=nrm(keys[7], (L, 1, H)),
        wo=nrm(keys[8], (L, H, H)), bo=nrm(keys[9], (L, 1, H)),
        g1=jnp.ones((L, 1, H), jnp.float32),
        be1=jnp.zeros((L, 1, H), jnp.float32),
        w1=nrm(keys[10], (L, H, P)), b1=nrm(keys[11], (L, 1, P)),
        w2=nrm(keys[12], (L, P, H)), b2=nrm(keys[13], (L, 1, H)),
        g2=jnp.ones((L, 1, H), jnp.float32),
        be2=jnp.zeros((L, 1, H), jnp.float32),
    )


if __name__ == "__main__":
    key = jax.random.PRNGKey(0)
    k_tok, k_par = jax.random.split(key)

    params = init_params(k_par)
    src_tokens = jax.random.randint(k_tok, (B, S), 0, VOCAB, dtype=jnp.int32)
    # src_mask: 1 = valid token, 0 = pad (second sequence has 3 padded slots)
    src_mask = jnp.array(
        [[1] * S,
         [1] * (S - 3) + [0] * 3], dtype=jnp.int32)

    fwd = jax.jit(encoder_forward)
    out = fwd(src_tokens, src_mask, params)
    out = jax.block_until_ready(out)

    ref = encoder_reference(src_tokens, src_mask, params)
    assert out.shape == (B, S, HID_DIM)
    assert jnp.allclose(out, ref, atol=1e-2, rtol=1e-2), "kernel mismatch vs reference"

    # TODO(synk): optional v7x-only variant: grid=(B,) marked "parallel" to use
    # both TensorCores; kept single-invocation here to avoid re-introducing
    # grid-step overhead on 1-TC v5e/v6e at this tiny problem size.
    print("KERNEL_OK")
</pallas_src>

<mosaic_0001>
module attributes {stable_mosaic.version = 11 : i64} {
  func.func @encoder_kernel(%arg0: memref<16x32xf32, #tpu.memory_space<vmem>>, %arg1: memref<16x16xf32, #tpu.memory_space<vmem>>, %arg2: memref<2x32x96xf32, #tpu.memory_space<vmem>>, %arg3: memref<2x32x32xf32, #tpu.memory_space<vmem>>, %arg4: memref<2x32x64xf32, #tpu.memory_space<vmem>>, %arg5: memref<2x64x32xf32, #tpu.memory_space<vmem>>, %arg6: memref<2x8x128xf32, #tpu.memory_space<vmem>>, %arg7: memref<16x32xf32, #tpu.memory_space<vmem>>) attributes {dimension_semantics = [], scalar_prefetch = 0 : i64, scratch_operands = 0 : i64, tpu.core_type = #tpu.core_type<tc>} {
    %c0 = arith.constant 0 : index
    %c0_0 = arith.constant 0 : index
    %0 = vector.load %arg0[%c0, %c0_0] : memref<16x32xf32, #tpu.memory_space<vmem>>, vector<16x32xf32>
    %c0_1 = arith.constant 0 : index
    %c0_2 = arith.constant 0 : index
    %1 = vector.load %arg1[%c0_1, %c0_2] : memref<16x16xf32, #tpu.memory_space<vmem>>, vector<16x16xf32>
    %c0_3 = arith.constant 0 : index
    %c0_4 = arith.constant 0 : index
    %c0_5 = arith.constant 0 : index
    %2 = vector.load %arg2[%c0_3, %c0_4, %c0_5] : memref<2x32x96xf32, #tpu.memory_space<vmem>>, vector<1x32x96xf32>
    %3 = vector.shape_cast %2 : vector<1x32x96xf32> to vector<32x96xf32>
    %c0_6 = arith.constant 0 : index
    %c0_7 = arith.constant 0 : index
    %c0_8 = arith.constant 0 : index
    %4 = vector.load %arg3[%c0_6, %c0_7, %c0_8] : memref<2x32x32xf32, #tpu.memory_space<vmem>>, vector<1x32x32xf32>
    %5 = vector.shape_cast %4 : vector<1x32x32xf32> to vector<32x32xf32>
    %c0_9 = arith.constant 0 : index
    %c0_10 = arith.constant 0 : index
    %c0_11 = arith.constant 0 : index
    %6 = vector.load %arg4[%c0_9, %c0_10, %c0_11] : memref<2x32x64xf32, #tpu.memory_space<vmem>>, vector<1x32x64xf32>
    %7 = vector.shape_cast %6 : vector<1x32x64xf32> to vector<32x64xf32>
    %c0_12 = arith.constant 0 : index
    %c0_13 = arith.constant 0 : index
    %c0_14 = arith.constant 0 : index
    %8 = vector.load %arg5[%c0_12, %c0_13, %c0_14] : memref<2x64x32xf32, #tpu.memory_space<vmem>>, vector<1x64x32xf32>
    %9 = vector.shape_cast %8 : vector<1x64x32xf32> to vector<64x32xf32>
    %c0_15 = arith.constant 0 : index
    %c0_16 = arith.constant 0 : index
    %c0_17 = arith.constant 0 : index
    %10 = vector.load %arg6[%c0_15, %c0_16, %c0_17] : memref<2x8x128xf32, #tpu.memory_space<vmem>>, vector<1x8x128xf32>
    %11 = vector.shape_cast %10 : vector<1x8x128xf32> to vector<8x128xf32>
    %12 = vector.extract_strided_slice %11 {offsets = [0, 0], sizes = [1, 96], strides = [1, 1]} : vector<8x128xf32> to vector<1x96xf32>
    %13 = vector.extract_strided_slice %11 {offsets = [1, 0], sizes = [1, 32], strides = [1, 1]} : vector<8x128xf32> to vector<1x32xf32>
    %14 = vector.extract_strided_slice %11 {offsets = [2, 0], sizes = [1, 32], strides = [1, 1]} : vector<8x128xf32> to vector<1x32xf32>
    %15 = vector.extract_strided_slice %11 {offsets = [3, 0], sizes = [1, 32], strides = [1, 1]} : vector<8x128xf32> to vector<1x32xf32>
    %16 = vector.extract_strided_slice %11 {offsets = [4, 0], sizes = [1, 64], strides = [1, 1]} : vector<8x128xf32> to vector<1x64xf32>
    %17 = vector.extract_strided_slice %11 {offsets = [5, 0], sizes = [1, 32], strides = [1, 1]} : vector<8x128xf32> to vector<1x32xf32>
    %18 = vector.extract_strided_slice %11 {offsets = [6, 0], sizes = [1, 32], strides = [1, 1]} : vector<8x128xf32> to vector<1x32xf32>
    %19 = vector.extract_strided_slice %11 {offsets = [7, 0], sizes = [1, 32], strides = [1, 1]} : vector<8x128xf32> to vector<1x32xf32>
    %cst = arith.constant dense<0.000000e+00> : vector<16x96xf32>
    %20 = tpu.matmul %0, %3, %cst {dimension_numbers = #tpu.dot_dimension_numbers<[1], [0], [0], [1], [0, 0, 1, 1], [], []>} : vector<16x32xf32>, vector<32x96xf32>, vector<16x96xf32> -> vector<16x96xf32>
    %21 = vector.broadcast %12 : vector<1x96xf32> to vector<16x96xf32>
    %22 = arith.addf %20, %21 : vector<16x96xf32>
    %23 = vector.extract_strided_slice %22 {offsets = [0, 0], sizes = [16, 8], strides = [1, 1]} : vector<16x96xf32> to vector<16x8xf32>
    %24 = vector.extract_strided_slice %22 {offsets = [0, 32], sizes = [16, 8], strides = [1, 1]} : vector<16x96xf32> to vector<16x8xf32>
    %25 = vector.extract_strided_slice %22 {offsets = [0, 64], sizes = [16, 8], strides = [1, 1]} : vector<16x96xf32> to vector<16x8xf32>
    %cst_18 = arith.constant dense<0.000000e+00> : vector<16x16xf32>
    %26 = tpu.matmul %23, %24, %cst_18 {dimension_numbers = #tpu.dot_dimension_numbers<[1], [1], [0], [0], [0, 0, 1, 0], [], []>} : vector<16x8xf32>, vector<16x8xf32>, vector<16x16xf32> -> vector<16x16xf32>
    %27 = arith.addf %26, %1 : vector<16x16xf32>
    %cst_19 = arith.constant dense<0xFF800000> : vector<16xf32>
    %28 = vector.multi_reduction <maximumf>, %27, %cst_19 [1] : vector<16x16xf32> to vector<16xf32>
    %29 = vector.shape_cast %28 : vector<16xf32> to vector<16x1xf32>
    %30 = vector.broadcast %29 : vector<16x1xf32> to vector<16x16xf32>
    %31 = arith.subf %27, %30 : vector<16x16xf32>
    %32 = math.exp %31 : vector<16x16xf32>
    %cst_20 = arith.constant dense<0.000000e+00> : vector<16xf32>
    %33 = vector.multi_reduction <add>, %32, %cst_20 [1] : vector<16x16xf32> to vector<16xf32>
    %34 = vector.shape_cast %33 : vector<16xf32> to vector<16x1xf32>
    %35 = tpu.reciprocal %34 {approx = true} : vector<16x1xf32> -> vector<16x1xf32>
    %36 = vector.broadcast %35 : vector<16x1xf32> to vector<16x16xf32>
    %37 = arith.mulf %32, %36 : vector<16x16xf32>
    %cst_21 = arith.constant dense<0.000000e+00> : vector<16x8xf32>
    %38 = tpu.matmul %37, %25, %cst_21 {dimension_numbers = #tpu.dot_dimension_numbers<[1], [0], [0], [1], [0, 0, 1, 1], [], []>} : vector<16x16xf32>, vector<16x8xf32>, vector<16x8xf32> -> vector<16x8xf32>
    %39 = vector.extract_strided_slice %5 {offsets = [0, 0], sizes = [8, 32], strides = [1, 1]} : vector<32x32xf32> to vector<8x32xf32>
    %cst_22 = arith.constant dense<0.000000e+00> : vector<16x32xf32>
    %40 = tpu.matmul %38, %39, %cst_22 {dimension_numbers = #tpu.dot_dimension_numbers<[1], [0], [0], [1], [0, 0, 1, 1], [], []>} : vector<16x8xf32>, vector<8x32xf32>, vector<16x32xf32> -> vector<16x32xf32>
    %41 = vector.extract_strided_slice %22 {offsets = [0, 8], sizes = [16, 8], strides = [1, 1]} : vector<16x96xf32> to vector<16x8xf32>
    %42 = vector.extract_strided_slice %22 {offsets = [0, 40], sizes = [16, 8], strides = [1, 1]} : vector<16x96xf32> to vector<16x8xf32>
    %43 = vector.extract_strided_slice %22 {offsets = [0, 72], sizes = [16, 8], strides = [1, 1]} : vector<16x96xf32> to vector<16x8xf32>
    %cst_23 = arith.constant dense<0.000000e+00> : vector<16x16xf32>
    %44 = tpu.matmul %41, %42, %cst_23 {dimension_numbers = #tpu.dot_dimension_numbers<[1], [1], [0], [0], [0, 0, 1, 0], [], []>} : vector<16x8xf32>, vector<16x8xf32>, vector<16x16xf32> -> vector<16x16xf32>
    %45 = arith.addf %44, %1 : vector<16x16xf32>
    %cst_24 = arith.constant dense<0xFF800000> : vector<16xf32>
    %46 = vector.multi_reduction <maximumf>, %45, %cst_24 [1] : vector<16x16xf32> to vector<16xf32>
    %47 = vector.shape_cast %46 : vector<16xf32> to vector<16x1xf32>
    %48 = vector.broadcast %47 : vector<16x1xf32> to vector<16x16xf32>
    %49 = arith.subf %45, %48 : vector<16x16xf32>
    %50 = math.exp %49 : vector<16x16xf32>
    %cst_25 = arith.constant dense<0.000000e+00> : vector<16xf32>
    %51 = vector.multi_reduction <add>, %50, %cst_25 [1] : vector<16x16xf32> to vector<16xf32>
    %52 = vector.shape_cast %51 : vector<16xf32> to vector<16x1xf32>
    %53 = tpu.reciprocal %52 {approx = true} : vector<16x1xf32> -> vector<16x1xf32>
    %54 = vector.broadcast %53 : vector<16x1xf32> to vector<16x16xf32>
    %55 = arith.mulf %50, %54 : vector<16x16xf32>
    %cst_26 = arith.constant dense<0.000000e+00> : vector<16x8xf32>
    %56 = tpu.matmul %55, %43, %cst_26 {dimension_numbers = #tpu.dot_dimension_numbers<[1], [0], [0], [1], [0, 0, 1, 1], [], []>} : vector<16x16xf32>, vector<16x8xf32>, vector<16x8xf32> -> vector<16x8xf32>
    %57 = vector.extract_strided_slice %5 {offsets = [8, 0], sizes = [8, 32], strides = [1, 1]} : vector<32x32xf32> to vector<8x32xf32>
    %cst_27 = arith.constant dense<0.000000e+00> : vector<16x32xf32>
    %58 = tpu.matmul %56, %57, %cst_27 {dimension_numbers = #tpu.dot_dimension_numbers<[1], [0], [0], [1], [0, 0, 1, 1], [], []>} : vector<16x8xf32>, vector<8x32xf32>, vector<16x32xf32> -> vector<16x32xf32>
    %59 = arith.addf %40, %58 : vector<16x32xf32>
    %60 = vector.extract_strided_slice %22 {offsets = [0, 16], sizes = [16, 8], strides = [1, 1]} : vector<16x96xf32> to vector<16x8xf32>
    %61 = vector.extract_strided_slice %22 {offsets = [0, 48], sizes = [16, 8], strides = [1, 1]} : vector<16x96xf32> to vector<16x8xf32>
    %62 = vector.extract_strided_slice %22 {offsets = [0, 80], sizes = [16, 8], strides = [1, 1]} : vector<16x96xf32> to vector<16x8xf32>
    %cst_28 = arith.constant dense<0.000000e+00> : vector<16x16xf32>
    %63 = tpu.matmul %60, %61, %cst_28 {dimension_numbers = #tpu.dot_dimension_numbers<[1], [1], [0], [0], [0, 0, 1, 0], [], []>} : vector<16x8xf32>, vector<16x8xf32>, vector<16x16xf32> -> vector<16x16xf32>
    %64 = arith.addf %63, %1 : vector<16x16xf32>
    %cst_29 = arith.constant dense<0xFF800000> : vector<16xf32>
    %65 = vector.multi_reduction <maximumf>, %64, %cst_29 [1] : vector<16x16xf32> to vector<16xf32>
    %66 = vector.shape_cast %65 : vector<16xf32> to vector<16x1xf32>
    %67 = vector.broadcast %66 : vector<16x1xf32> to vector<16x16xf32>
    %68 = arith.subf %64, %67 : vector<16x16xf32>
    %69 = math.exp %68 : vector<16x16xf32>
    %cst_30 = arith.constant dense<0.000000e+00> : vector<16xf32>
    %70 = vector.multi_reduction <add>, %69, %cst_30 [1] : vector<16x16xf32> to vector<16xf32>
    %71 = vector.shape_cast %70 : vector<16xf32> to vector<16x1xf32>
    %72 = tpu.reciprocal %71 {approx = true} : vector<16x1xf32> -> vector<16x1xf32>
    %73 = vector.broadcast %72 : vector<16x1xf32> to vector<16x16xf32>
    %74 = arith.mulf %69, %73 : vector<16x16xf32>
    %cst_31 = arith.constant dense<0.000000e+00> : vector<16x8xf32>
    %75 = tpu.matmul %74, %62, %cst_31 {dimension_numbers = #tpu.dot_dimension_numbers<[1], [0], [0], [1], [0, 0, 1, 1], [], []>} : vector<16x16xf32>, vector<16x8xf32>, vector<16x8xf32> -> vector<16x8xf32>
    %76 = vector.extract_strided_slice %5 {offsets = [16, 0], sizes = [8, 32], strides = [1, 1]} : vector<32x32xf32> to vector<8x32xf32>
    %cst_32 = arith.constant dense<0.000000e+00> : vector<16x32xf32>
    %77 = tpu.matmul %75, %76, %cst_32 {dimension_numbers = #tpu.dot_dimension_numbers<[1], [0], [0], [1], [0, 0, 1, 1], [], []>} : vector<16x8xf32>, vector<8x32xf32>, vector<16x32xf32> -> vector<16x32xf32>
    %78 = arith.addf %59, %77 : vector<16x32xf32>
    %79 = vector.extract_strided_slice %22 {offsets = [0, 24], sizes = [16, 8], strides = [1, 1]} : vector<16x96xf32> to vector<16x8xf32>
    %80 = vector.extract_strided_slice %22 {offsets = [0, 56], sizes = [16, 8], strides = [1, 1]} : vector<16x96xf32> to vector<16x8xf32>
    %81 = vector.extract_strided_slice %22 {offsets = [0, 88], sizes = [16, 8], strides = [1, 1]} : vector<16x96xf32> to vector<16x8xf32>
    %cst_33 = arith.constant dense<0.000000e+00> : vector<16x16xf32>
    %82 = tpu.matmul %79, %80, %cst_33 {dimension_numbers = #tpu.dot_dimension_numbers<[1], [1], [0], [0], [0, 0, 1, 0], [], []>} : vector<16x8xf32>, vector<16x8xf32>, vector<16x16xf32> -> vector<16x16xf32>
    %83 = arith.addf %82, %1 : vector<16x16xf32>
    %cst_34 = arith.constant dense<0xFF800000> : vector<16xf32>
    %84 = vector.multi_reduction <maximumf>, %83, %cst_34 [1] : vector<16x16xf32> to vector<16xf32>
    %85 = vector.shape_cast %84 : vector<16xf32> to vector<16x1xf32>
    %86 = vector.broadcast %85 : vector<16x1xf32> to vector<16x16xf32>
    %87 = arith.subf %83, %86 : vector<16x16xf32>
    %88 = math.exp %87 : vector<16x16xf32>
    %cst_35 = arith.constant dense<0.000000e+00> : vector<16xf32>
    %89 = vector.multi_reduction <add>, %88, %cst_35 [1] : vector<16x16xf32> to vector<16xf32>
    %90 = vector.shape_cast %89 : vector<16xf32> to vector<16x1xf32>
    %91 = tpu.reciprocal %90 {approx = true} : vector<16x1xf32> -> vector<16x1xf32>
    %92 = vector.broadcast %91 : vector<16x1xf32> to vector<16x16xf32>
    %93 = arith.mulf %88, %92 : vector<16x16xf32>
    %cst_36 = arith.constant dense<0.000000e+00> : vector<16x8xf32>
    %94 = tpu.matmul %93, %81, %cst_36 {dimension_numbers = #tpu.dot_dimension_numbers<[1], [0], [0], [1], [0, 0, 1, 1], [], []>} : vector<16x16xf32>, vector<16x8xf32>, vector<16x8xf32> -> vector<16x8xf32>
    %95 = vector.extract_strided_slice %5 {offsets = [24, 0], sizes = [8, 32], strides = [1, 1]} : vector<32x32xf32> to vector<8x32xf32>
    %cst_37 = arith.constant dense<0.000000e+00> : vector<16x32xf32>
    %96 = tpu.matmul %94, %95, %cst_37 {dimension_numbers = #tpu.dot_dimension_numbers<[1], [0], [0], [1], [0, 0, 1, 1], [], []>} : vector<16x8xf32>, vector<8x32xf32>, vector<16x32xf32> -> vector<16x32xf32>
    %97 = arith.addf %78, %96 : vector<16x32xf32>
    %98 = vector.broadcast %13 : vector<1x32xf32> to vector<16x32xf32>
    %99 = arith.addf %97, %98 : vector<16x32xf32>
    %100 = arith.addf %0, %99 : vector<16x32xf32>
    %cst_38 = arith.constant dense<0.000000e+00> : vector<16xf32>
    %101 = vector.multi_reduction <add>, %100, %cst_38 [1] : vector<16x32xf32> to vector<16xf32>
    %102 = vector.shape_cast %101 : vector<16xf32> to vector<16x1xf32>
    %cst_39 = arith.constant 3.200000e+01 : f32
    %103 = vector.broadcast %cst_39 : f32 to vector<16x1xf32>
    %104 = arith.divf %102, %103 : vector<16x1xf32>
    %105 = vector.broadcast %104 : vector<16x1xf32> to vector<16x32xf32>
    %106 = arith.subf %100, %105 : vector<16x32xf32>
    %107 = arith.mulf %106, %106 : vector<16x32xf32>
    %cst_40 = arith.constant dense<0.000000e+00> : vector<16xf32>
    %108 = vector.multi_reduction <add>, %107, %cst_40 [1] : vector<16x32xf32> to vector<16xf32>
    %109 = vector.shape_cast %108 : vector<16xf32> to vector<16x1xf32>
    %cst_41 = arith.constant 3.200000e+01 : f32
    %110 = vector.broadcast %cst_41 : f32 to vector<16x1xf32>
    %111 = arith.divf %109, %110 : vector<16x1xf32>
    %112 = vector.broadcast %104 : vector<16x1xf32> to vector<16x32xf32>
    %113 = arith.subf %100, %112 : vector<16x32xf32>
    %cst_42 = arith.constant 9.99999974E-6 : f32
    %114 = vector.broadcast %cst_42 : f32 to vector<16x1xf32>
    %115 = arith.addf %111, %114 : vector<16x1xf32>
    %116 = math.rsqrt %115 : vector<16x1xf32>
    %117 = vector.broadcast %116 : vector<16x1xf32> to vector<16x32xf32>
    %118 = arith.mulf %113, %117 : vector<16x32xf32>
    %119 = vector.broadcast %14 : vector<1x32xf32> to vector<16x32xf32>
    %120 = arith.mulf %118, %119 : vector<16x32xf32>
    %121 = vector.broadcast %15 : vector<1x32xf32> to vector<16x32xf32>
    %122 = arith.addf %120, %121 : vector<16x32xf32>
    %cst_43 = arith.constant dense<0.000000e+00> : vector<16x64xf32>
    %123 = tpu.matmul %122, %7, %cst_43 {dimension_numbers = #tpu.dot_dimension_numbers<[1], [0], [0], [1], [0, 0, 1, 1], [], []>} : vector<16x32xf32>, vector<32x64xf32>, vector<16x64xf32> -> vector<16x64xf32>
    %124 = vector.broadcast %16 : vector<1x64xf32> to vector<16x64xf32>
    %125 = arith.addf %123, %124 : vector<16x64xf32>
    %cst_44 = arith.constant 0.000000e+00 : f32
    %126 = vector.broadcast %cst_44 : f32 to vector<16x64xf32>
    %127 = arith.maximumf %125, %126 : vector<16x64xf32>
    %cst_45 = arith.constant dense<0.000000e+00> : vector<16x32xf32>
    %128 = tpu.matmul %127, %9, %cst_45 {dimension_numbers = #tpu.dot_dimension_numbers<[1], [0], [0], [1], [0, 0, 1, 1], [], []>} : vector<16x64xf32>, vector<64x32xf32>, vector<16x32xf32> -> vector<16x32xf32>
    %129 = vector.broadcast %17 : vector<1x32xf32> to vector<16x32xf32>
    %130 = arith.addf %128, %129 : vector<16x32xf32>
    %131 = arith.addf %122, %130 : vector<16x32xf32>
    %cst_46 = arith.constant dense<0.000000e+00> : vector<16xf32>
    %132 = vector.multi_reduction <add>, %131, %cst_46 [1] : vector<16x32xf32> to vector<16xf32>
    %133 = vector.shape_cast %132 : vector<16xf32> to vector<16x1xf32>
    %cst_47 = arith.constant 3.200000e+01 : f32
    %134 = vector.broadcast %cst_47 : f32 to vector<16x1xf32>
    %135 = arith.divf %133, %134 : vector<16x1xf32>
    %136 = vector.broadcast %135 : vector<16x1xf32> to vector<16x32xf32>
    %137 = arith.subf %131, %136 : vector<16x32xf32>
    %138 = arith.mulf %137, %137 : vector<16x32xf32>
    %cst_48 = arith.constant dense<0.000000e+00> : vector<16xf32>
    %139 = vector.multi_reduction <add>, %138, %cst_48 [1] : vector<16x32xf32> to vector<16xf32>
    %140 = vector.shape_cast %139 : vector<16xf32> to vector<16x1xf32>
    %cst_49 = arith.constant 3.200000e+01 : f32
    %141 = vector.broadcast %cst_49 : f32 to vector<16x1xf32>
    %142 = arith.divf %140, %141 : vector<16x1xf32>
    %143 = vector.broadcast %135 : vector<16x1xf32> to vector<16x32xf32>
    %144 = arith.subf %131, %143 : vector<16x32xf32>
    %cst_50 = arith.constant 9.99999974E-6 : f32
    %145 = vector.broadcast %cst_50 : f32 to vector<16x1xf32>
    %146 = arith.addf %142, %145 : vector<16x1xf32>
    %147 = math.rsqrt %146 : vector<16x1xf32>
    %148 = vector.broadcast %147 : vector<16x1xf32> to vector<16x32xf32>
    %149 = arith.mulf %144, %148 : vector<16x32xf32>
    %150 = vector.broadcast %18 : vector<1x32xf32> to vector<16x32xf32>
    %151 = arith.mulf %149, %150 : vector<16x32xf32>
    %152 = vector.broadcast %19 : vector<1x32xf32> to vector<16x32xf32>
    %153 = arith.addf %151, %152 : vector<16x32xf32>
    %c1 = arith.constant 1 : index
    %c0_51 = arith.constant 0 : index
    %c0_52 = arith.constant 0 : index
    %154 = vector.load %arg2[%c1, %c0_51, %c0_52] : memref<2x32x96xf32, #tpu.memory_space<vmem>>, vector<1x32x96xf32>
    %155 = vector.shape_cast %154 : vector<1x32x96xf32> to vector<32x96xf32>
    %c1_53 = arith.constant 1 : index
    %c0_54 = arith.constant 0 : index
    %c0_55 = arith.constant 0 : index
    %156 = vector.load %arg3[%c1_53, %c0_54, %c0_55] : memref<2x32x32xf32, #tpu.memory_space<vmem>>, vector<1x32x32xf32>
    %157 = vector.shape_cast %156 : vector<1x32x32xf32> to vector<32x32xf32>
    %c1_56 = arith.constant 1 : index
    %c0_57 = arith.constant 0 : index
    %c0_58 = arith.constant 0 : index
    %158 = vector.load %arg4[%c1_56, %c0_57, %c0_58] : memref<2x32x64xf32, #tpu.memory_space<vmem>>, vector<1x32x64xf32>
    %159 = vector.shape_cast %158 : vector<1x32x64xf32> to vector<32x64xf32>
    %c1_59 = arith.constant 1 : index
    %c0_60 = arith.constant 0 : index
    %c0_61 = arith.constant 0 : index
    %160 = vector.load %arg5[%c1_59, %c0_60, %c0_61] : memref<2x64x32xf32, #tpu.memory_space<vmem>>, vector<1x64x32xf32>
    %161 = vector.shape_cast %160 : vector<1x64x32xf32> to vector<64x32xf32>
    %c1_62 = arith.constant 1 : index
    %c0_63 = arith.constant 0 : index
    %c0_64 = arith.constant 0 : index
    %162 = vector.load %arg6[%c1_62, %c0_63, %c0_64] : memref<2x8x128xf32, #tpu.memory_space<vmem>>, vector<1x8x128xf32>
    %163 = vector.shape_cast %162 : vector<1x8x128xf32> to vector<8x128xf32>
    %164 = vector.extract_strided_slice %163 {offsets = [0, 0], sizes = [1, 96], strides = [1, 1]} : vector<8x128xf32> to vector<1x96xf32>
    %165 = vector.extract_strided_slice %163 {offsets = [1, 0], sizes = [1, 32], strides = [1, 1]} : vector<8x128xf32> to vector<1x32xf32>
    %166 = vector.extract_strided_slice %163 {offsets = [2, 0], sizes = [1, 32], strides = [1, 1]} : vector<8x128xf32> to vector<1x32xf32>
    %167 = vector.extract_strided_slice %163 {offsets = [3, 0], sizes = [1, 32], strides = [1, 1]} : vector<8x128xf32> to vector<1x32xf32>
    %168 = vector.extract_strided_slice %163 {offsets = [4, 0], sizes = [1, 64], strides = [1, 1]} : vector<8x128xf32> to vector<1x64xf32>
    %169 = vector.extract_strided_slice %163 {offsets = [5, 0], sizes = [1, 32], strides = [1, 1]} : vector<8x128xf32> to vector<1x32xf32>
    %170 = vector.extract_strided_slice %163 {offsets = [6, 0], sizes = [1, 32], strides = [1, 1]} : vector<8x128xf32> to vector<1x32xf32>
    %171 = vector.extract_strided_slice %163 {offsets = [7, 0], sizes = [1, 32], strides = [1, 1]} : vector<8x128xf32> to vector<1x32xf32>
    %cst_65 = arith.constant dense<0.000000e+00> : vector<16x96xf32>
    %172 = tpu.matmul %153, %155, %cst_65 {dimension_numbers = #tpu.dot_dimension_numbers<[1], [0], [0], [1], [0, 0, 1, 1], [], []>} : vector<16x32xf32>, vector<32x96xf32>, vector<16x96xf32> -> vector<16x96xf32>
    %173 = vector.broadcast %164 : vector<1x96xf32> to vector<16x96xf32>
    %174 = arith.addf %172, %173 : vector<16x96xf32>
    %175 = vector.extract_strided_slice %174 {offsets = [0, 0], sizes = [16, 8], strides = [1, 1]} : vector<16x96xf32> to vector<16x8xf32>
    %176 = vector.extract_strided_slice %174 {offsets = [0, 32], sizes = [16, 8], strides = [1, 1]} : vector<16x96xf32> to vector<16x8xf32>
    %177 = vector.extract_strided_slice %174 {offsets = [0, 64], sizes = [16, 8], strides = [1, 1]} : vector<16x96xf32> to vector<16x8xf32>
    %cst_66 = arith.constant dense<0.000000e+00> : vector<16x16xf32>
    %178 = tpu.matmul %175, %176, %cst_66 {dimension_numbers = #tpu.dot_dimension_numbers<[1], [1], [0], [0], [0, 0, 1, 0], [], []>} : vector<16x8xf32>, vector<16x8xf32>, vector<16x16xf32> -> vector<16x16xf32>
    %179 = arith.addf %178, %1 : vector<16x16xf32>
    %cst_67 = arith.constant dense<0xFF800000> : vector<16xf32>
    %180 = vector.multi_reduction <maximumf>, %179, %cst_67 [1] : vector<16x16xf32> to vector<16xf32>
    %181 = vector.shape_cast %180 : vector<16xf32> to vector<16x1xf32>
    %182 = vector.broadcast %181 : vector<16x1xf32> to vector<16x16xf32>
    %183 = arith.subf %179, %182 : vector<16x16xf32>
    %184 = math.exp %183 : vector<16x16xf32>
    %cst_68 = arith.constant dense<0.000000e+00> : vector<16xf32>
    %185 = vector.multi_reduction <add>, %184, %cst_68 [1] : vector<16x16xf32> to vector<16xf32>
    %186 = vector.shape_cast %185 : vector<16xf32> to vector<16x1xf32>
    %187 = tpu.reciprocal %186 {approx = true} : vector<16x1xf32> -> vector<16x1xf32>
    %188 = vector.broadcast %187 : vector<16x1xf32> to vector<16x16xf32>
    %189 = arith.mulf %184, %188 : vector<16x16xf32>
    %cst_69 = arith.constant dense<0.000000e+00> : vector<16x8xf32>
    %190 = tpu.matmul %189, %177, %cst_69 {dimension_numbers = #tpu.dot_dimension_numbers<[1], [0], [0], [1], [0, 0, 1, 1], [], []>} : vector<16x16xf32>, vector<16x8xf32>, vector<16x8xf32> -> vector<16x8xf32>
    %191 = vector.extract_strided_slice %157 {offsets = [0, 0], sizes = [8, 32], strides = [1, 1]} : vector<32x32xf32> to vector<8x32xf32>
    %cst_70 = arith.constant dense<0.000000e+00> : vector<16x32xf32>
    %192 = tpu.matmul %190, %191, %cst_70 {dimension_numbers = #tpu.dot_dimension_numbers<[1], [0], [0], [1], [0, 0, 1, 1], [], []>} : vector<16x8xf32>, vector<8x32xf32>, vector<16x32xf32> -> vector<16x32xf32>
    %193 = vector.extract_strided_slice %174 {offsets = [0, 8], sizes = [16, 8], strides = [1, 1]} : vector<16x96xf32> to vector<16x8xf32>
    %194 = vector.extract_strided_slice %174 {offsets = [0, 40], sizes = [16, 8], strides = [1, 1]} : vector<16x96xf32> to vector<16x8xf32>
    %195 = vector.extract_strided_slice %174 {offsets = [0, 72], sizes = [16, 8], strides = [1, 1]} : vector<16x96xf32> to vector<16x8xf32>
    %cst_71 = arith.constant dense<0.000000e+00> : vector<16x16xf32>
    %196 = tpu.matmul %193, %194, %cst_71 {dimension_numbers = #tpu.dot_dimension_numbers<[1], [1], [0], [0], [0, 0, 1, 0], [], []>} : vector<16x8xf32>, vector<16x8xf32>, vector<16x16xf32> -> vector<16x16xf32>
    %197 = arith.addf %196, %1 : vector<16x16xf32>
    %cst_72 = arith.constant dense<0xFF800000> : vector<16xf32>
    %198 = vector.multi_reduction <maximumf>, %197, %cst_72 [1] : vector<16x16xf32> to vector<16xf32>
    %199 = vector.shape_cast %198 : vector<16xf32> to vector<16x1xf32>
    %200 = vector.broadcast %199 : vector<16x1xf32> to vector<16x16xf32>
    %201 = arith.subf %197, %200 : vector<16x16xf32>
    %202 = math.exp %201 : vector<16x16xf32>
    %cst_73 = arith.constant dense<0.000000e+00> : vector<16xf32>
    %203 = vector.multi_reduction <add>, %202, %cst_73 [1] : vector<16x16xf32> to vector<16xf32>
    %204 = vector.shape_cast %203 : vector<16xf32> to vector<16x1xf32>
    %205 = tpu.reciprocal %204 {approx = true} : vector<16x1xf32> -> vector<16x1xf32>
    %206 = vector.broadcast %205 : vector<16x1xf32> to vector<16x16xf32>
    %207 = arith.mulf %202, %206 : vector<16x16xf32>
    %cst_74 = arith.constant dense<0.000000e+00> : vector<16x8xf32>
    %208 = tpu.matmul %207, %195, %cst_74 {dimension_numbers = #tpu.dot_dimension_numbers<[1], [0], [0], [1], [0, 0, 1, 1], [], []>} : vector<16x16xf32>, vector<16x8xf32>, vector<16x8xf32> -> vector<16x8xf32>
    %209 = vector.extract_strided_slice %157 {offsets = [8, 0], sizes = [8, 32], strides = [1, 1]} : vector<32x32xf32> to vector<8x32xf32>
    %cst_75 = arith.constant dense<0.000000e+00> : vector<16x32xf32>
    %210 = tpu.matmul %208, %209, %cst_75 {dimension_numbers = #tpu.dot_dimension_numbers<[1], [0], [0], [1], [0, 0, 1, 1], [], []>} : vector<16x8xf32>, vector<8x32xf32>, vector<16x32xf32> -> vector<16x32xf32>
    %211 = arith.addf %192, %210 : vector<16x32xf32>
    %212 = vector.extract_strided_slice %174 {offsets = [0, 16], sizes = [16, 8], strides = [1, 1]} : vector<16x96xf32> to vector<16x8xf32>
    %213 = vector.extract_strided_slice %174 {offsets = [0, 48], sizes = [16, 8], strides = [1, 1]} : vector<16x96xf32> to vector<16x8xf32>
    %214 = vector.extract_strided_slice %174 {offsets = [0, 80], sizes = [16, 8], strides = [1, 1]} : vector<16x96xf32> to vector<16x8xf32>
    %cst_76 = arith.constant dense<0.000000e+00> : vector<16x16xf32>
    %215 = tpu.matmul %212, %213, %cst_76 {dimension_numbers = #tpu.dot_dimension_numbers<[1], [1], [0], [0], [0, 0, 1, 0], [], []>} : vector<16x8xf32>, vector<16x8xf32>, vector<16x16xf32> -> vector<16x16xf32>
    %216 = arith.addf %215, %1 : vector<16x16xf32>
    %cst_77 = arith.constant dense<0xFF800000> : vector<16xf32>
    %217 = vector.multi_reduction <maximumf>, %216, %cst_77 [1] : vector<16x16xf32> to vector<16xf32>
    %218 = vector.shape_cast %217 : vector<16xf32> to vector<16x1xf32>
    %219 = vector.broadcast %218 : vector<16x1xf32> to vector<16x16xf32>
    %220 = arith.subf %216, %219 : vector<16x16xf32>
    %221 = math.exp %220 : vector<16x16xf32>
    %cst_78 = arith.constant dense<0.000000e+00> : vector<16xf32>
    %222 = vector.multi_reduction <add>, %221, %cst_78 [1] : vector<16x16xf32> to vector<16xf32>
    %223 = vector.shape_cast %222 : vector<16xf32> to vector<16x1xf32>
    %224 = tpu.reciprocal %223 {approx = true} : vector<16x1xf32> -> vector<16x1xf32>
    %225 = vector.broadcast %224 : vector<16x1xf32> to vector<16x16xf32>
    %226 = arith.mulf %221, %225 : vector<16x16xf32>
    %cst_79 = arith.constant dense<0.000000e+00> : vector<16x8xf32>
    %227 = tpu.matmul %226, %214, %cst_79 {dimension_numbers = #tpu.dot_dimension_numbers<[1], [0], [0], [1], [0, 0, 1, 1], [], []>} : vector<16x16xf32>, vector<16x8xf32>, vector<16x8xf32> -> vector<16x8xf32>
    %228 = vector.extract_strided_slice %157 {offsets = [16, 0], sizes = [8, 32], strides = [1, 1]} : vector<32x32xf32> to vector<8x32xf32>
    %cst_80 = arith.constant dense<0.000000e+00> : vector<16x32xf32>
    %229 = tpu.matmul %227, %228, %cst_80 {dimension_numbers = #tpu.dot_dimension_numbers<[1], [0], [0], [1], [0, 0, 1, 1], [], []>} : vector<16x8xf32>, vector<8x32xf32>, vector<16x32xf32> -> vector<16x32xf32>
    %230 = arith.addf %211, %229 : vector<16x32xf32>
    %231 = vector.extract_strided_slice %174 {offsets = [0, 24], sizes = [16, 8], strides = [1, 1]} : vector<16x96xf32> to vector<16x8xf32>
    %232 = vector.extract_strided_slice %174 {offsets = [0, 56], sizes = [16, 8], strides = [1, 1]} : vector<16x96xf32> to vector<16x8xf32>
    %233 = vector.extract_strided_slice %174 {offsets = [0, 88], sizes = [16, 8], strides = [1, 1]} : vector<16x96xf32> to vector<16x8xf32>
    %cst_81 = arith.constant dense<0.000000e+00> : vector<16x16xf32>
    %234 = tpu.matmul %231, %232, %cst_81 {dimension_numbers = #tpu.dot_dimension_numbers<[1], [1], [0], [0], [0, 0, 1, 0], [], []>} : vector<16x8xf32>, vector<16x8xf32>, vector<16x16xf32> -> vector<16x16xf32>
    %235 = arith.addf %234, %1 : vector<16x16xf32>
    %cst_82 = arith.constant dense<0xFF800000> : vector<16xf32>
    %236 = vector.multi_reduction <maximumf>, %235, %cst_82 [1] : vector<16x16xf32> to vector<16xf32>
    %237 = vector.shape_cast %236 : vector<16xf32> to vector<16x1xf32>
    %238 = vector.broadcast %237 : vector<16x1xf32> to vector<16x16xf32>
    %239 = arith.subf %235, %238 : vector<16x16xf32>
    %240 = math.exp %239 : vector<16x16xf32>
    %cst_83 = arith.constant dense<0.000000e+00> : vector<16xf32>
    %241 = vector.multi_reduction <add>, %240, %cst_83 [1] : vector<16x16xf32> to vector<16xf32>
    %242 = vector.shape_cast %241 : vector<16xf32> to vector<16x1xf32>
    %243 = tpu.reciprocal %242 {approx = true} : vector<16x1xf32> -> vector<16x1xf32>
    %244 = vector.broadcast %243 : vector<16x1xf32> to vector<16x16xf32>
    %245 = arith.mulf %240, %244 : vector<16x16xf32>
    %cst_84 = arith.constant dense<0.000000e+00> : vector<16x8xf32>
    %246 = tpu.matmul %245, %233, %cst_84 {dimension_numbers = #tpu.dot_dimension_numbers<[1], [0], [0], [1], [0, 0, 1, 1], [], []>} : vector<16x16xf32>, vector<16x8xf32>, vector<16x8xf32> -> vector<16x8xf32>
    %247 = vector.extract_strided_slice %157 {offsets = [24, 0], sizes = [8, 32], strides = [1, 1]} : vector<32x32xf32> to vector<8x32xf32>
    %cst_85 = arith.constant dense<0.000000e+00> : vector<16x32xf32>
    %248 = tpu.matmul %246, %247, %cst_85 {dimension_numbers = #tpu.dot_dimension_numbers<[1], [0], [0], [1], [0, 0, 1, 1], [], []>} : vector<16x8xf32>, vector<8x32xf32>, vector<16x32xf32> -> vector<16x32xf32>
    %249 = arith.addf %230, %248 : vector<16x32xf32>
    %250 = vector.broadcast %165 : vector<1x32xf32> to vector<16x32xf32>
    %251 = arith.addf %249, %250 : vector<16x32xf32>
    %252 = arith.addf %153, %251 : vector<16x32xf32>
    %cst_86 = arith.constant dense<0.000000e+00> : vector<16xf32>
    %253 = vector.multi_reduction <add>, %252, %cst_86 [1] : vector<16x32xf32> to vector<16xf32>
    %254 = vector.shape_cast %253 : vector<16xf32> to vector<16x1xf32>
    %cst_87 = arith.constant 3.200000e+01 : f32
    %255 = vector.broadcast %cst_87 : f32 to vector<16x1xf32>
    %256 = arith.divf %254, %255 : vector<16x1xf32>
    %257 = vector.broadcast %256 : vector<16x1xf32> to vector<16x32xf32>
    %258 = arith.subf %252, %257 : vector<16x32xf32>
    %259 = arith.mulf %258, %258 : vector<16x32xf32>
    %cst_88 = arith.constant dense<0.000000e+00> : vector<16xf32>
    %260 = vector.multi_reduction <add>, %259, %cst_88 [1] : vector<16x32xf32> to vector<16xf32>
    %261 = vector.shape_cast %260 : vector<16xf32> to vector<16x1xf32>
    %cst_89 = arith.constant 3.200000e+01 : f32
    %262 = vector.broadcast %cst_89 : f32 to vector<16x1xf32>
    %263 = arith.divf %261, %262 : vector<16x1xf32>
    %264 = vector.broadcast %256 : vector<16x1xf32> to vector<16x32xf32>
    %265 = arith.subf %252, %264 : vector<16x32xf32>
    %cst_90 = arith.constant 9.99999974E-6 : f32
    %266 = vector.broadcast %cst_90 : f32 to vector<16x1xf32>
    %267 = arith.addf %263, %266 : vector<16x1xf32>
    %268 = math.rsqrt %267 : vector<16x1xf32>
    %269 = vector.broadcast %268 : vector<16x1xf32> to vector<16x32xf32>
    %270 = arith.mulf %265, %269 : vector<16x32xf32>
    %271 = vector.broadcast %166 : vector<1x32xf32> to vector<16x32xf32>
    %272 = arith.mulf %270, %271 : vector<16x32xf32>
    %273 = vector.broadcast %167 : vector<1x32xf32> to vector<16x32xf32>
    %274 = arith.addf %272, %273 : vector<16x32xf32>
    %cst_91 = arith.constant dense<0.000000e+00> : vector<16x64xf32>
    %275 = tpu.matmul %274, %159, %cst_91 {dimension_numbers = #tpu.dot_dimension_numbers<[1], [0], [0], [1], [0, 0, 1, 1], [], []>} : vector<16x32xf32>, vector<32x64xf32>, vector<16x64xf32> -> vector<16x64xf32>
    %276 = vector.broadcast %168 : vector<1x64xf32> to vector<16x64xf32>
    %277 = arith.addf %275, %276 : vector<16x64xf32>
    %cst_92 = arith.constant 0.000000e+00 : f32
    %278 = vector.broadcast %cst_92 : f32 to vector<16x64xf32>
    %279 = arith.maximumf %277, %278 : vector<16x64xf32>
    %cst_93 = arith.constant dense<0.000000e+00> : vector<16x32xf32>
    %280 = tpu.matmul %279, %161, %cst_93 {dimension_numbers = #tpu.dot_dimension_numbers<[1], [0], [0], [1], [0, 0, 1, 1], [], []>} : vector<16x64xf32>, vector<64x32xf32>, vector<16x32xf32> -> vector<16x32xf32>
    %281 = vector.broadcast %169 : vector<1x32xf32> to vector<16x32xf32>
    %282 = arith.addf %280, %281 : vector<16x32xf32>
    %283 = arith.addf %274, %282 : vector<16x32xf32>
    %cst_94 = arith.constant dense<0.000000e+00> : vector<16xf32>
    %284 = vector.multi_reduction <add>, %283, %cst_94 [1] : vector<16x32xf32> to vector<16xf32>
    %285 = vector.shape_cast %284 : vector<16xf32> to vector<16x1xf32>
    %cst_95 = arith.constant 3.200000e+01 : f32
    %286 = vector.broadcast %cst_95 : f32 to vector<16x1xf32>
    %287 = arith.divf %285, %286 : vector<16x1xf32>
    %288 = vector.broadcast %287 : vector<16x1xf32> to vector<16x32xf32>
    %289 = arith.subf %283, %288 : vector<16x32xf32>
    %290 = arith.mulf %289, %289 : vector<16x32xf32>
    %cst_96 = arith.constant dense<0.000000e+00> : vector<16xf32>
    %291 = vector.multi_reduction <add>, %290, %cst_96 [1] : vector<16x32xf32> to vector<16xf32>
    %292 = vector.shape_cast %291 : vector<16xf32> to vector<16x1xf32>
    %cst_97 = arith.constant 3.200000e+01 : f32
    %293 = vector.broadcast %cst_97 : f32 to vector<16x1xf32>
    %294 = arith.divf %292, %293 : vector<16x1xf32>
    %295 = vector.broadcast %287 : vector<16x1xf32> to vector<16x32xf32>
    %296 = arith.subf %283, %295 : vector<16x32xf32>
    %cst_98 = arith.constant 9.99999974E-6 : f32
    %297 = vector.broadcast %cst_98 : f32 to vector<16x1xf32>
    %298 = arith.addf %294, %297 : vector<16x1xf32>
    %299 = math.rsqrt %298 : vector<16x1xf32>
    %300 = vector.broadcast %299 : vector<16x1xf32> to vector<16x32xf32>
    %301 = arith.mulf %296, %300 : vector<16x32xf32>
    %302 = vector.broadcast %170 : vector<1x32xf32> to vector<16x32xf32>
    %303 = arith.mulf %301, %302 : vector<16x32xf32>
    %304 = vector.broadcast %171 : vector<1x32xf32> to vector<16x32xf32>
    %305 = arith.addf %303, %304 : vector<16x32xf32>
    %c0_99 = arith.constant 0 : index
    %c0_100 = arith.constant 0 : index
    %306 = vector.load %arg7[%c0_99, %c0_100] : memref<16x32xf32, #tpu.memory_space<vmem>>, vector<16x32xf32>
    tpu.vector_store %arg7[%c0_99, %c0_100], %305 {strides = array<i32>} : memref<16x32xf32, #tpu.memory_space<vmem>>, vector<16x32xf32>,
    return
  }
}

</mosaic_0001>

<llo_original>
// kernel: encoder_forward.1
$region0: #{encoder_forward.1}
  #allocation0 [shape = 'u32[]', space=smem, size = 0x4, offset = 0x4, fixed_abs, tag = 'smem constant byte address 0x4 - core index']
  #allocation1 [shape = 'u32[72,128]{1,0:T(1,128)}', space=vmem, size = 0x9000, scoped, tag = 'internal scratch']
  %s0 = inlined_call_operand.vmem [shape: f32[16,32], index: 0, kind: input, shape index: {}]
  %s1 = inlined_call_operand.vmem [shape: f32[16,16], index: 1, kind: input, shape index: {}]
  %s2 = inlined_call_operand.vmem [shape: f32[2,32,96], index: 2, kind: input, shape index: {}]
  %s3 = inlined_call_operand.vmem [shape: f32[2,32,32], index: 3, kind: input, shape index: {}]
  %s4 = inlined_call_operand.vmem [shape: f32[2,32,64], index: 4, kind: input, shape index: {}]
  %s5 = inlined_call_operand.vmem [shape: f32[2,64,32], index: 5, kind: input, shape index: {}]
  %s6 = inlined_call_operand.vmem [shape: f32[2,8,128], index: 6, kind: input, shape index: {}]
  %s7 = inlined_call_operand.hbm [shape: f32[16,32], index: 7, kind: output, shape index: {}]
  %s8 = sld [smem:[#allocation0]]
  $region38: #{encoder_forward.1} parent=0
    _
  %s10 = ssub.s32 1, %s8
  %s11 = scalar_select 0, %s10, %s8
  $region1: #{encoder_forward.1} parent=0
    #allocation2 [shape = 'u8[8192]{0}', space=vmem, size = 0x2000, scoped, tag = 'output window, operand 0, single buffered']
    #allocation3 [shape = 's32[1]{0}', space=sflag, size = 0x4, scoped, tag = 'scoped memory for encoder_forward.1']
    %12 = vsyncpa [#allocation3], 0
    // Predicated region
    $region2: #{encoder_forward.1} parent=1 // pred_check
      _
    $region3: #{encoder_forward.1} parent=1 // pred_check_branch
      %14 = sbr.rel (0) target = $region5
    $region4: #{encoder_forward.1} parent=1 // pred_region
      _
    $region5: #{encoder_forward.1} parent=1 // pred_fallthru
      _
    // Predicated region
    $region6: #{encoder_forward.1} parent=1 // pred_check
      _
    $region7: #{encoder_forward.1} parent=1 // pred_check_branch
      %16 = sbr.rel (0) target = $region9
    $region8: #{encoder_forward.1} parent=1 // pred_region
      _
    $region9: #{encoder_forward.1} parent=1 // pred_fallthru
      _
    // Predicated region
    $region10: #{encoder_forward.1} parent=1 // pred_check
      _
    $region11: #{encoder_forward.1} parent=1 // pred_check_branch
      %18 = sbr.rel (0) target = $region13
    $region12: #{encoder_forward.1} parent=1 // pred_region
      _
    $region13: #{encoder_forward.1} parent=1 // pred_fallthru
      _
    // Predicated region
    $region14: #{encoder_forward.1} parent=1 // pred_check
      _
    $region15: #{encoder_forward.1} parent=1 // pred_check_branch
      %20 = sbr.rel (0) target = $region17
    $region16: #{encoder_forward.1} parent=1 // pred_region
      _
    $region17: #{encoder_forward.1} parent=1 // pred_fallthru
      _
    // Predicated region
    $region18: #{encoder_forward.1} parent=1 // pred_check
      _
    $region19: #{encoder_forward.1} parent=1 // pred_check_branch
      %22 = sbr.rel (0) target = $region21
    $region20: #{encoder_forward.1} parent=1 // pred_region
      _
    $region21: #{encoder_forward.1} parent=1 // pred_fallthru
      _
    // Predicated region
    $region22: #{encoder_forward.1} parent=1 // pred_check
      _
    $region23: #{encoder_forward.1} parent=1 // pred_check_branch
      %24 = sbr.rel (0) target = $region25
    $region24: #{encoder_forward.1} parent=1 // pred_region
      _
    $region25: #{encoder_forward.1} parent=1 // pred_fallthru
      _
    // Predicated region
    $region26: #{encoder_forward.1} parent=1 // pred_check
      _
    $region27: #{encoder_forward.1} parent=1 // pred_check_branch
      %26 = sbr.rel (0) target = $region29
    $region28: #{encoder_forward.1} parent=1 // pred_region
      _
    $region29: #{encoder_forward.1} parent=1 // pred_fallthru
      _
    %v27 = vld [vmem:[%s0] sm:$0xff]
    %v28 = vld [vmem:[%s0 + $0x8] sm:$0xff]
    %v29 = vld [vmem:[%s1] sm:$0xff]
    %v30 = vld [vmem:[%s1 + $0x8] sm:$0xff]
    %v31 = vld [vmem:[%s2] sm:$0xff]
    %v32 = vld [vmem:[%s2 + $0x8] sm:$0xff]
    %v33 = vld [vmem:[%s2 + $0x10] sm:$0xff]
    %v34 = vld [vmem:[%s2 + $0x18] sm:$0xff]
    %v35 = vld [vmem:[%s3] sm:$0xff]
    %v36 = vld [vmem:[%s3 + $0x8] sm:$0xff]
    %v37 = vld [vmem:[%s3 + $0x10] sm:$0xff]
    %v38 = vld [vmem:[%s3 + $0x18] sm:$0xff]
    %v39 = vld [vmem:[%s4] sm:$0xff]
    %v40 = vld [vmem:[%s4 + $0x8] sm:$0xff]
    %v41 = vld [vmem:[%s4 + $0x10] sm:$0xff]
    %v42 = vld [vmem:[%s4 + $0x18] sm:$0xff]
    %v43 = vld [vmem:[%s5] sm:$0xff]
    %v44 = vld [vmem:[%s5 + $0x8] sm:$0xff]
    %v45 = vld [vmem:[%s5 + $0x10] sm:$0xff]
    %v46 = vld [vmem:[%s5 + $0x18] sm:$0xff]
    %v47 = vld [vmem:[%s5 + $0x20] sm:$0xff]
    %v48 = vld [vmem:[%s5 + $0x28] sm:$0xff]
    %v49 = vld [vmem:[%s5 + $0x30] sm:$0xff]
    %v50 = vld [vmem:[%s5 + $0x38] sm:$0xff]
    %v51 = vld [vmem:[%s6] sm:$0xff]
    %v52 = vperm.slane %v51, 0
    %vm53 = vcmask 261120
    %v55 = vsel %vm53, %v27, 0
    %v58 = vsel %vm53, %v28, 0
    %60 = vmatpush.msra.mxu0 0.0
    %61 = vmatpush.msra.mxu0 0.0
    %62 = vmatpush.msra.mxu0 0.0
    %63 = vmatpush.msra.mxu0 0.0
    %64 = vmatpush.msra.mxu0 0.0
    %65 = vmatpush.msra.mxu0 0.0
    %66 = vmatpush.msra.mxu0 0.0
    %67 = vmatpush.msra.mxu0 0.0
    %68 = vmatpush.msra.mxu0 0.0
    %69 = vmatpush.msra.mxu0 0.0
    %70 = vmatpush.msra.mxu0 0.0
    %71 = vmatpush.msra.mxu0 0.0
    %72 = vmatpush.msra.mxu0 %v34
    %73 = vmatpush.msra.mxu0 %v33
    %74 = vmatpush.msra.mxu0 %v32
    %75 = vmatpush.msra.mxu0 %v31
    %76 = vmatmul.f32.gmra.mxu0 %v55
    %v77 = vpop.f32.mrf.mxu0
    %v78 = vadd.f32 %v52, %v77
    %79 = vmatmul.f32.gmra.mxu0 %v58
    %v80 = vpop.f32.mrf.mxu0
    %v81 = vadd.f32 %v52, %v80
    %82 = vdwg.mxu0
    %85 = vrot.lane.b32.xlu0 %v78, 96
    %v86 = vpop.permute.xlu0 %85
    %87 = vrot.lane.b32.xlu0 %v81, 96
    %v88 = vpop.permute.xlu0 %87
    %vm89 = vcmask 64512
    %v90 = vsel %vm89, %v78, 0
    %v92 = vsel %vm89, %v81, 0
    %v94 = vsel %vm89, %v86, 0
    %v96 = vsel %vm89, %v88, 0
    %98 = vmatpush.xpose.msra.mxu0 0.0
    %99 = vmatpush.xpose.msra.mxu0 0.0
    %100 = vmatpush.xpose.msra.mxu0 0.0
    %101 = vmatpush.xpose.msra.mxu0 0.0
    %102 = vmatpush.xpose.msra.mxu0 0.0
    %103 = vmatpush.xpose.msra.mxu0 0.0
    %104 = vmatpush.xpose.msra.mxu0 0.0
    %105 = vmatpush.xpose.msra.mxu0 0.0
    %106 = vmatpush.xpose.msra.mxu0 0.0
    %107 = vmatpush.xpose.msra.mxu0 0.0
    %108 = vmatpush.xpose.msra.mxu0 0.0
    %109 = vmatpush.xpose.msra.mxu0 0.0
    %110 = vmatpush.xpose.msra.mxu0 0.0
    %111 = vmatpush.xpose.msra.mxu0 0.0
    %112 = vmatpush.xpose.msra.mxu0 %v96
    %113 = vmatpush.xpose.msra.mxu0 %v94
    %114 = vmatmul.f32.gmra.mxu0 %v90
    %v115 = vpop.f32.mrf.mxu0
    %v116 = vadd.f32 %v29, %v115
    %117 = vmatmul.f32.gmra.mxu0 %v92
    %v118 = vpop.f32.mrf.mxu0
    %v119 = vadd.f32 %v30, %v118
    %120 = vdwg.mxu0
    %vm121 = vcmask 130048
    %v122 = vsel %vm121, %v116, -inf
    %123 = vmax.xlane.f32.xlu0 %v122
    %v124 = vpop.xlane.xlu0 %123
    %v125 = vsel %vm121, %v119, -inf
    %126 = vmax.xlane.f32.xlu0 %v125
    %v127 = vpop.xlane.xlu0 %126
    %v128 = vsub.f32 %v116, %v124
    %v129 = vsub.f32 %v119, %v127
    %v130 = vmul.f32 %v128, 1.442695
    %v131 = vpow.pop %v130
    %v132 = vmul.f32 %v129, 1.442695
    %v133 = vpow.pop %v132
    %v134 = vsel %vm121, %v131, 0.0
    %135 = vadd.xlane.f32.xlu0 %v134
    %v136 = vpop.xlane.xlu0 %135
    %v137 = vsel %vm121, %v133, 0.0
    %138 = vadd.xlane.f32.xlu0 %v137
    %v139 = vpop.xlane.xlu0 %138
    %v140 = vrcp.pop %v136
    %v141 = vrcp.pop %v139
    %v142 = vmul.f32 %v131, %v140
    %v143 = vmul.f32 %v133, %v141
    %144 = vrot.lane.b32.xlu0 %v78, 64
    %v145 = vpop.permute.xlu0 %144
    %146 = vrot.lane.b32.xlu0 %v81, 64
    %v147 = vpop.permute.xlu0 %146
    %v151 = vsel %vm121, %v142, 0
    %v154 = vsel %vm121, %v143, 0
    %156 = vmatpush.msra.mxu0 0.0
    %157 = vmatpush.msra.mxu0 0.0
    %158 = vmatpush.msra.mxu0 0.0
    %159 = vmatpush.msra.mxu0 0.0
    %160 = vmatpush.msra.mxu0 0.0
    %161 = vmatpush.msra.mxu0 0.0
    %162 = vmatpush.msra.mxu0 0.0
    %163 = vmatpush.msra.mxu0 0.0
    %164 = vmatpush.msra.mxu0 0.0
    %165 = vmatpush.msra.mxu0 0.0
    %166 = vmatpush.msra.mxu0 0.0
    %167 = vmatpush.msra.mxu0 0.0
    %168 = vmatpush.msra.mxu0 0.0
    %169 = vmatpush.msra.mxu0 0.0
    %170 = vmatpush.msra.mxu0 %v147
    %171 = vmatpush.msra.mxu0 %v145
    %172 = vmatmul.f32.gmra.mxu0 %v151
    %v173 = vpop.f32.mrf.mxu0
    %v174 = vadd.f32 0.0, %v173
    %175 = vmatmul.f32.gmra.mxu0 %v154
    %v176 = vpop.f32.mrf.mxu0
    %v177 = vadd.f32 0.0, %v176
    %178 = vdwg.mxu0
    %179 = vrot.lane.b32.xlu0 %v78, 120
    %v180 = vpop.permute.xlu0 %179
    %181 = vrot.lane.b32.xlu0 %v81, 120
    %v182 = vpop.permute.xlu0 %181
    %183 = vrot.lane.b32.xlu0 %v78, 88
    %v184 = vpop.permute.xlu0 %183
    %185 = vrot.lane.b32.xlu0 %v81, 88
    %v186 = vpop.permute.xlu0 %185
    %v187 = vsel %vm89, %v180, 0
    %v189 = vsel %vm89, %v182, 0
    %v191 = vsel %vm89, %v184, 0
    %v193 = vsel %vm89, %v186, 0
    %195 = vmatpush.xpose.msra.mxu0 0.0
    %196 = vmatpush.xpose.msra.mxu0 0.0
    %197 = vmatpush.xpose.msra.mxu0 0.0
    %198 = vmatpush.xpose.msra.mxu0 0.0
    %199 = vmatpush.xpose.msra.mxu0 0.0
    %200 = vmatpush.xpose.msra.mxu0 0.0
    %201 = vmatpush.xpose.msra.mxu0 0.0
    %202 = vmatpush.xpose.msra.mxu0 0.0
    %203 = vmatpush.xpose.msra.mxu0 0.0
    %204 = vmatpush.xpose.msra.mxu0 0.0
    %205 = vmatpush.xpose.msra.mxu0 0.0
    %206 = vmatpush.xpose.msra.mxu0 0.0
    %207 = vmatpush.xpose.msra.mxu0 0.0
    %208 = vmatpush.xpose.msra.mxu0 0.0
    %209 = vmatpush.xpose.msra.mxu0 %v193
    %210 = vmatpush.xpose.msra.mxu0 %v191
    %211 = vmatmul.f32.gmra.mxu0 %v187
    %v212 = vpop.f32.mrf.mxu0
    %v213 = vadd.f32 %v29, %v212
    %214 = vmatmul.f32.gmra.mxu0 %v189
    %v215 = vpop.f32.mrf.mxu0
    %v216 = vadd.f32 %v30, %v215
    %217 = vdwg.mxu0
    %v218 = vsel %vm121, %v213, -inf
    %219 = vmax.xlane.f32.xlu0 %v218
    %v220 = vpop.xlane.xlu0 %219
    %v221 = vsel %vm121, %v216, -inf
    %222 = vmax.xlane.f32.xlu0 %v221
    %v223 = vpop.xlane.xlu0 %222
    %v224 = vsub.f32 %v213, %v220
    %v225 = vsub.f32 %v216, %v223
    %v226 = vmul.f32 %v224, 1.442695
    %v227 = vpow.pop %v226
    %v228 = vmul.f32 %v225, 1.442695
    %v229 = vpow.pop %v228
    %v230 = vsel %vm121, %v227, 0.0
    %231 = vadd.xlane.f32.xlu0 %v230
    %v232 = vpop.xlane.xlu0 %231
    %v233 = vsel %vm121, %v229, 0.0
    %234 = vadd.xlane.f32.xlu0 %v233
    %v235 = vpop.xlane.xlu0 %234
    %v236 = vrcp.pop %v232
    %v237 = vrcp.pop %v235
    %v238 = vmul.f32 %v227, %v236
    %v239 = vmul.f32 %v229, %v237
    %240 = vrot.lane.b32.xlu0 %v78, 56
    %v241 = vpop.permute.xlu0 %240
    %242 = vrot.lane.b32.xlu0 %v81, 56
    %v243 = vpop.permute.xlu0 %242
    %v247 = vsel %vm121, %v238, 0
    %v250 = vsel %vm121, %v239, 0
    %252 = vmatpush.msra.mxu0 0.0
    %253 = vmatpush.msra.mxu0 0.0
    %254 = vmatpush.msra.mxu0 0.0
    %255 = vmatpush.msra.mxu0 0.0
    %256 = vmatpush.msra.mxu0 0.0
    %257 = vmatpush.msra.mxu0 0.0
    %258 = vmatpush.msra.mxu0 0.0
    %259 = vmatpush.msra.mxu0 0.0
    %260 = vmatpush.msra.mxu0 0.0
    %261 = vmatpush.msra.mxu0 0.0
    %262 = vmatpush.msra.mxu0 0.0
    %263 = vmatpush.msra.mxu0 0.0
    %264 = vmatpush.msra.mxu0 0.0
    %265 = vmatpush.msra.mxu0 0.0
    %266 = vmatpush.msra.mxu0 %v243
    %267 = vmatpush.msra.mxu0 %v241
    %268 = vmatmul.f32.gmra.mxu0 %v247
    %v269 = vpop.f32.mrf.mxu0
    %v270 = vadd.f32 0.0, %v269
    %271 = vmatmul.f32.gmra.mxu0 %v250
    %v272 = vpop.f32.mrf.mxu0
    %v273 = vadd.f32 0.0, %v272
    %274 = vdwg.mxu0
    %v276 = vsel %vm89, %v270, 0
    %v279 = vsel %vm89, %v273, 0
    %281 = vmatpush.msra.mxu0 0.0
    %282 = vmatpush.msra.mxu0 0.0
    %283 = vmatpush.msra.mxu0 0.0
    %284 = vmatpush.msra.mxu0 0.0
    %285 = vmatpush.msra.mxu0 0.0
    %286 = vmatpush.msra.mxu0 0.0
    %287 = vmatpush.msra.mxu0 0.0
    %288 = vmatpush.msra.mxu0 0.0
    %289 = vmatpush.msra.mxu0 0.0
    %290 = vmatpush.msra.mxu0 0.0
    %291 = vmatpush.msra.mxu0 0.0
    %292 = vmatpush.msra.mxu0 0.0
    %293 = vmatpush.msra.mxu0 0.0
    %294 = vmatpush.msra.mxu0 0.0
    %295 = vmatpush.msra.mxu0 0.0
    %296 = vmatpush.msra.mxu0 %v36
    %297 = vmatmul.f32.gmra.mxu0 %v276
    %v298 = vpop.f32.mrf.mxu0
    %v299 = vadd.f32 0.0, %v298
    %300 = vmatmul.f32.gmra.mxu0 %v279
    %v301 = vpop.f32.mrf.mxu0
    %v302 = vadd.f32 0.0, %v301
    %303 = vdwg.mxu0
    %v305 = vsel %vm89, %v174, 0
    %v308 = vsel %vm89, %v177, 0
    %310 = vmatpush.msra.mxu0 0.0
    %311 = vmatpush.msra.mxu0 0.0
    %312 = vmatpush.msra.mxu0 0.0
    %313 = vmatpush.msra.mxu0 0.0
    %314 = vmatpush.msra.mxu0 0.0
    %315 = vmatpush.msra.mxu0 0.0
    %316 = vmatpush.msra.mxu0 0.0
    %317 = vmatpush.msra.mxu0 0.0
    %318 = vmatpush.msra.mxu0 0.0
    %319 = vmatpush.msra.mxu0 0.0
    %320 = vmatpush.msra.mxu0 0.0
    %321 = vmatpush.msra.mxu0 0.0
    %322 = vmatpush.msra.mxu0 0.0
    %323 = vmatpush.msra.mxu0 0.0
    %324 = vmatpush.msra.mxu0 0.0
    %325 = vmatpush.msra.mxu0 %v35
    %326 = vmatmul.f32.gmra.mxu0 %v305
    %v327 = vpop.f32.mrf.mxu0
    %v328 = vadd.f32 %v299, %v327
    %329 = vmatmul.f32.gmra.mxu0 %v308
    %v330 = vpop.f32.mrf.mxu0
    %v331 = vadd.f32 %v302, %v330
    %332 = vdwg.mxu0
    %333 = vrot.lane.b32.xlu0 %v78, 112
    %v334 = vpop.permute.xlu0 %333
    %335 = vrot.lane.b32.xlu0 %v81, 112
    %v336 = vpop.permute.xlu0 %335
    %337 = vrot.lane.b32.xlu0 %v78, 80
    %v338 = vpop.permute.xlu0 %337
    %339 = vrot.lane.b32.xlu0 %v81, 80
    %v340 = vpop.permute.xlu0 %339
    %v341 = vsel %vm89, %v334, 0
    %v343 = vsel %vm89, %v336, 0
    %v345 = vsel %vm89, %v338, 0
    %v347 = vsel %vm89, %v340, 0
    %349 = vmatpush.xpose.msra.mxu0 0.0
    %350 = vmatpush.xpose.msra.mxu0 0.0
    %351 = vmatpush.xpose.msra.mxu0 0.0
    %352 = vmatpush.xpose.msra.mxu0 0.0
    %353 = vmatpush.xpose.msra.mxu0 0.0
    %354 = vmatpush.xpose.msra.mxu0 0.0
    %355 = vmatpush.xpose.msra.mxu0 0.0
    %356 = vmatpush.xpose.msra.mxu0 0.0
    %357 = vmatpush.xpose.msra.mxu0 0.0
    %358 = vmatpush.xpose.msra.mxu0 0.0
    %359 = vmatpush.xpose.msra.mxu0 0.0
    %360 = vmatpush.xpose.msra.mxu0 0.0
    %361 = vmatpush.xpose.msra.mxu0 0.0
    %362 = vmatpush.xpose.msra.mxu0 0.0
    %363 = vmatpush.xpose.msra.mxu0 %v347
    %364 = vmatpush.xpose.msra.mxu0 %v345
    %365 = vmatmul.f32.gmra.mxu0 %v341
    %v366 = vpop.f32.mrf.mxu0
    %v367 = vadd.f32 %v29, %v366
    %368 = vmatmul.f32.gmra.mxu0 %v343
    %v369 = vpop.f32.mrf.mxu0
    %v370 = vadd.f32 %v30, %v369
    %371 = vdwg.mxu0
    %v372 = vsel %vm121, %v367, -inf
    %373 = vmax.xlane.f32.xlu0 %v372
    %v374 = vpop.xlane.xlu0 %373
    %v375 = vsel %vm121, %v370, -inf
    %376 = vmax.xlane.f32.xlu0 %v375
    %v377 = vpop.xlane.xlu0 %376
    %v378 = vsub.f32 %v367, %v374
    %v379 = vsub.f32 %v370, %v377
    %v380 = vmul.f32 %v378, 1.442695
    %v381 = vpow.pop %v380
    %v382 = vmul.f32 %v379, 1.442695
    %v383 = vpow.pop %v382
    %v384 = vsel %vm121, %v381, 0.0
    %385 = vadd.xlane.f32.xlu0 %v384
    %v386 = vpop.xlane.xlu0 %385
    %v387 = vsel %vm121, %v383, 0.0
    %388 = vadd.xlane.f32.xlu0 %v387
    %v389 = vpop.xlane.xlu0 %388
    %v390 = vrcp.pop %v386
    %v391 = vrcp.pop %v389
    %v392 = vmul.f32 %v381, %v390
    %v393 = vmul.f32 %v383, %v391
    %394 = vrot.lane.b32.xlu0 %v78, 48
    %v395 = vpop.permute.xlu0 %394
    %396 = vrot.lane.b32.xlu0 %v81, 48
    %v397 = vpop.permute.xlu0 %396
    %v401 = vsel %vm121, %v392, 0
    %v404 = vsel %vm121, %v393, 0
    %406 = vmatpush.msra.mxu0 0.0
    %407 = vmatpush.msra.mxu0 0.0
    %408 = vmatpush.msra.mxu0 0.0
    %409 = vmatpush.msra.mxu0 0.0
    %410 = vmatpush.msra.mxu0 0.0
    %411 = vmatpush.msra.mxu0 0.0
    %412 = vmatpush.msra.mxu0 0.0
    %413 = vmatpush.msra.mxu0 0.0
    %414 = vmatpush.msra.mxu0 0.0
    %415 = vmatpush.msra.mxu0 0.0
    %416 = vmatpush.msra.mxu0 0.0
    %417 = vmatpush.msra.mxu0 0.0
    %418 = vmatpush.msra.mxu0 0.0
    %419 = vmatpush.msra.mxu0 0.0
    %420 = vmatpush.msra.mxu0 %v397
    %421 = vmatpush.msra.mxu0 %v395
    %422 = vmatmul.f32.gmra.mxu0 %v401
    %v423 = vpop.f32.mrf.mxu0
    %v424 = vadd.f32 0.0, %v423
    %425 = vmatmul.f32.gmra.mxu0 %v404
    %v426 = vpop.f32.mrf.mxu0
    %v427 = vadd.f32 0.0, %v426
    %428 = vdwg.mxu0
    %v430 = vsel %vm89, %v424, 0
    %v433 = vsel %vm89, %v427, 0
    %435 = vmatpush.msra.mxu0 0.0
    %436 = vmatpush.msra.mxu0 0.0
    %437 = vmatpush.msra.mxu0 0.0
    %438 = vmatpush.msra.mxu0 0.0
    %439 = vmatpush.msra.mxu0 0.0
    %440 = vmatpush.msra.mxu0 0.0
    %441 = vmatpush.msra.mxu0 0.0
    %442 = vmatpush.msra.mxu0 0.0
    %443 = vmatpush.msra.mxu0 0.0
    %444 = vmatpush.msra.mxu0 0.0
    %445 = vmatpush.msra.mxu0 0.0
    %446 = vmatpush.msra.mxu0 0.0
    %447 = vmatpush.msra.mxu0 0.0
    %448 = vmatpush.msra.mxu0 0.0
    %449 = vmatpush.msra.mxu0 0.0
    %450 = vmatpush.msra.mxu0 %v37
    %451 = vmatmul.f32.gmra.mxu0 %v430
    %v452 = vpop.f32.mrf.mxu0
    %v453 = vadd.f32 0.0, %v452
    %454 = vmatmul.f32.gmra.mxu0 %v433
    %v455 = vpop.f32.mrf.mxu0
    %v456 = vadd.f32 0.0, %v455
    %457 = vdwg.mxu0
    %v458 = vadd.f32 %v328, %v453
    %v459 = vadd.f32 %v331, %v456
    %460 = vrot.lane.b32.xlu0 %v78, 104
    %v461 = vpop.permute.xlu0 %460
    %462 = vrot.lane.b32.xlu0 %v81, 104
    %v463 = vpop.permute.xlu0 %462
    %464 = vrot.lane.b32.xlu0 %v78, 72
    %v465 = vpop.permute.xlu0 %464
    %466 = vrot.lane.b32.xlu0 %v81, 72
    %v467 = vpop.permute.xlu0 %466
    %v468 = vsel %vm89, %v461, 0
    %v470 = vsel %vm89, %v463, 0
    %v472 = vsel %vm89, %v465, 0
    %v474 = vsel %vm89, %v467, 0
    %476 = vmatpush.xpose.msra.mxu0 0.0
    %477 = vmatpush.xpose.msra.mxu0 0.0
    %478 = vmatpush.xpose.msra.mxu0 0.0
    %479 = vmatpush.xpose.msra.mxu0 0.0
    %480 = vmatpush.xpose.msra.mxu0 0.0
    %481 = vmatpush.xpose.msra.mxu0 0.0
    %482 = vmatpush.xpose.msra.mxu0 0.0
    %483 = vmatpush.xpose.msra.mxu0 0.0
    %484 = vmatpush.xpose.msra.mxu0 0.0
    %485 = vmatpush.xpose.msra.mxu0 0.0
    %486 = vmatpush.xpose.msra.mxu0 0.0
    %487 = vmatpush.xpose.msra.mxu0 0.0
    %488 = vmatpush.xpose.msra.mxu0 0.0
    %489 = vmatpush.xpose.msra.mxu0 0.0
    %490 = vmatpush.xpose.msra.mxu0 %v474
    %491 = vmatpush.xpose.msra.mxu0 %v472
    %492 = vmatmul.f32.gmra.mxu0 %v468
    %v493 = vpop.f32.mrf.mxu0
    %v494 = vadd.f32 %v29, %v493
    %495 = vmatmul.f32.gmra.mxu0 %v470
    %v496 = vpop.f32.mrf.mxu0
    %v497 = vadd.f32 %v30, %v496
    %498 = vdwg.mxu0
    %v499 = vsel %vm121, %v494, -inf
    %500 = vmax.xlane.f32.xlu0 %v499
    %v501 = vpop.xlane.xlu0 %500
    %v502 = vsel %vm121, %v497, -inf
    %503 = vmax.xlane.f32.xlu0 %v502
    %v504 = vpop.xlane.xlu0 %503
    %v505 = vsub.f32 %v494, %v501
    %v506 = vsub.f32 %v497, %v504
    %v507 = vmul.f32 %v505, 1.442695
    %v508 = vpow.pop %v507
    %v509 = vmul.f32 %v506, 1.442695
    %v510 = vpow.pop %v509
    %v511 = vsel %vm121, %v508, 0.0
    %512 = vadd.xlane.f32.xlu0 %v511
    %v513 = vpop.xlane.xlu0 %512
    %v514 = vsel %vm121, %v510, 0.0
    %515 = vadd.xlane.f32.xlu0 %v514
    %v516 = vpop.xlane.xlu0 %515
    %v517 = vrcp.pop %v513
    %v518 = vrcp.pop %v516
    %v519 = vmul.f32 %v508, %v517
    %v520 = vmul.f32 %v510, %v518
    %521 = vrot.lane.b32.xlu0 %v78, 40
    %v522 = vpop.permute.xlu0 %521
    %523 = vrot.lane.b32.xlu0 %v81, 40
    %v524 = vpop.permute.xlu0 %523
    %v528 = vsel %vm121, %v519, 0
    %v531 = vsel %vm121, %v520, 0
    %533 = vmatpush.msra.mxu0 0.0
    %534 = vmatpush.msra.mxu0 0.0
    %535 = vmatpush.msra.mxu0 0.0
    %536 = vmatpush.msra.mxu0 0.0
    %537 = vmatpush.msra.mxu0 0.0
    %538 = vmatpush.msra.mxu0 0.0
    %539 = vmatpush.msra.mxu0 0.0
    %540 = vmatpush.msra.mxu0 0.0
    %541 = vmatpush.msra.mxu0 0.0
    %542 = vmatpush.msra.mxu0 0.0
    %543 = vmatpush.msra.mxu0 0.0
    %544 = vmatpush.msra.mxu0 0.0
    %545 = vmatpush.msra.mxu0 0.0
    %546 = vmatpush.msra.mxu0 0.0
    %547 = vmatpush.msra.mxu0 %v524
    %548 = vmatpush.msra.mxu0 %v522
    %549 = vmatmul.f32.gmra.mxu0 %v528
    %v550 = vpop.f32.mrf.mxu0
    %v551 = vadd.f32 0.0, %v550
    %552 = vmatmul.f32.gmra.mxu0 %v531
    %v553 = vpop.f32.mrf.mxu0
    %v554 = vadd.f32 0.0, %v553
    %555 = vdwg.mxu0
    %v557 = vsel %vm89, %v551, 0
    %v560 = vsel %vm89, %v554, 0
    %562 = vmatpush.msra.mxu0 0.0
    %563 = vmatpush.msra.mxu0 0.0
    %564 = vmatpush.msra.mxu0 0.0
    %565 = vmatpush.msra.mxu0 0.0
    %566 = vmatpush.msra.mxu0 0.0
    %567 = vmatpush.msra.mxu0 0.0
    %568 = vmatpush.msra.mxu0 0.0
    %569 = vmatpush.msra.mxu0 0.0
    %570 = vmatpush.msra.mxu0 0.0
    %571 = vmatpush.msra.mxu0 0.0
    %572 = vmatpush.msra.mxu0 0.0
    %573 = vmatpush.msra.mxu0 0.0
    %574 = vmatpush.msra.mxu0 0.0
    %575 = vmatpush.msra.mxu0 0.0
    %576 = vmatpush.msra.mxu0 0.0
    %577 = vmatpush.msra.mxu0 %v38
    %578 = vmatmul.f32.gmra.mxu0 %v557
    %v579 = vpop.f32.mrf.mxu0
    %v580 = vadd.f32 0.0, %v579
    %581 = vmatmul.f32.gmra.mxu0 %v560
    %v582 = vpop.f32.mrf.mxu0
    %v583 = vadd.f32 0.0, %v582
    %584 = vdwg.mxu0
    %v585 = vadd.f32 %v458, %v580
    %v586 = vadd.f32 %v459, %v583
    %v587 = vperm.slane %v51, 1
    %v588 = vadd.f32 %v585, %v587
    %v589 = vadd.f32 %v586, %v587
    %v590 = vadd.f32 %v27, %v588
    %v591 = vadd.f32 %v28, %v589
    %v592 = vsel %vm53, %v590, 0.0
    %593 = vadd.xlane.f32.xlu0 %v592
    %v594 = vpop.xlane.xlu0 %593
    %v595 = vsel %vm53, %v591, 0.0
    %596 = vadd.xlane.f32.xlu0 %v595
    %v597 = vpop.xlane.xlu0 %596
    %v598 = vrcp.pop 32.0
    %v599 = vmul.f32 32.0, %v598
    %v600 = vsub.f32 1.0, %v599
    %v601 = vmul.f32 %v598, %v600
    %v602 = vadd.f32 %v598, %v601
    %vm603 = vweird.f32 %v598
    %v604 = vsel %vm603, %v598, %v602
    %v605 = vmul.f32 %v594, %v604
    %v606 = vmul.f32 %v597, %v604
    %v607 = vsub.f32 %v590, %v605
    %v608 = vsub.f32 %v591, %v606
    %v609 = vmul.f32 %v607, %v607
    %v610 = vmul.f32 %v608, %v608
    %v611 = vsel %vm53, %v609, 0.0
    %612 = vadd.xlane.f32.xlu0 %v611
    %v613 = vpop.xlane.xlu0 %612
    %v614 = vsel %vm53, %v610, 0.0
    %615 = vadd.xlane.f32.xlu0 %v614
    %v616 = vpop.xlane.xlu0 %615
    %v617 = vmul.f32 %v613, %v604
    %v618 = vmul.f32 %v616, %v604
    %v619 = vadd.f32 %v617, 1e-05
    %v620 = vadd.f32 %v618, 1e-05
    %v621 = vrsqrt.pop %v619
    %v622 = vmul.f32 %v621, %v619
    %v623 = vmul.f32 %v622, %v621
    %v624 = vmul.f32 0.5, %v623
    %v625 = vsub.f32 1.5, %v624
    %v626 = vmul.f32 %v621, %v625
    %vm627 = vweird.f32 %v619
    %vm628 = vweird.f32 %v621
    %vm629 = vmor %vm627, %vm628
    %v630 = vsel %vm629, %v621, %v626
    %v631 = vrsqrt.pop %v620
    %v632 = vmul.f32 %v631, %v620
    %v633 = vmul.f32 %v632, %v631
    %v634 = vmul.f32 0.5, %v633
    %v635 = vsub.f32 1.5, %v634
    %v636 = vmul.f32 %v631, %v635
    %vm637 = vweird.f32 %v620
    %vm638 = vweird.f32 %v631
    %vm639 = vmor %vm637, %vm638
    %v640 = vsel %vm639, %v631, %v636
    %v641 = vmul.f32 %v607, %v630
    %v642 = vmul.f32 %v608, %v640
    %v643 = vperm.slane %v51, 2
    %v644 = vmul.f32 %v641, %v643
    %v645 = vmul.f32 %v642, %v643
    %v646 = vperm.slane %v51, 3
    %v647 = vadd.f32 %v644, %v646
    %v648 = vadd.f32 %v645, %v646
    %v649 = vperm.slane %v51, 4
    %v651 = vsel %vm53, %v647, 0
    %v654 = vsel %vm53, %v648, 0
    %656 = vmatpush.msra.mxu0 0.0
    %657 = vmatpush.msra.mxu0 0.0
    %658 = vmatpush.msra.mxu0 0.0
    %659 = vmatpush.msra.mxu0 0.0
    %660 = vmatpush.msra.mxu0 0.0
    %661 = vmatpush.msra.mxu0 0.0
    %662 = vmatpush.msra.mxu0 0.0
    %663 = vmatpush.msra.mxu0 0.0
    %664 = vmatpush.msra.mxu0 0.0
    %665 = vmatpush.msra.mxu0 0.0
    %666 = vmatpush.msra.mxu0 0.0
    %667 = vmatpush.msra.mxu0 0.0
    %668 = vmatpush.msra.mxu0 %v42
    %669 = vmatpush.msra.mxu0 %v41
    %670 = vmatpush.msra.mxu0 %v40
    %671 = vmatpush.msra.mxu0 %v39
    %672 = vmatmul.f32.gmra.mxu0 %v651
    %v673 = vpop.f32.mrf.mxu0
    %v674 = vadd.f32 %v649, %v673
    %675 = vmatmul.f32.gmra.mxu0 %v654
    %v676 = vpop.f32.mrf.mxu0
    %v677 = vadd.f32 %v649, %v676
    %678 = vdwg.mxu0
    %v679 = vmax.f32 %v674, 0.0
    %v680 = vmax.f32 %v677, 0.0
    %v681 = vperm.slane %v51, 5
    %vm682 = vcmask 523264
    %v684 = vsel %vm682, %v679, 0
    %v687 = vsel %vm682, %v680, 0
    %689 = vmatpush.msra.mxu0 0.0
    %690 = vmatpush.msra.mxu0 0.0
    %691 = vmatpush.msra.mxu0 0.0
    %692 = vmatpush.msra.mxu0 0.0
    %693 = vmatpush.msra.mxu0 0.0
    %694 = vmatpush.msra.mxu0 0.0
    %695 = vmatpush.msra.mxu0 0.0
    %696 = vmatpush.msra.mxu0 0.0
    %697 = vmatpush.msra.mxu0 %v50
    %698 = vmatpush.msra.mxu0 %v49
    %699 = vmatpush.msra.mxu0 %v48
    %700 = vmatpush.msra.mxu0 %v47
    %701 = vmatpush.msra.mxu0 %v46
    %702 = vmatpush.msra.mxu0 %v45
    %703 = vmatpush.msra.mxu0 %v44
    %704 = vmatpush.msra.mxu0 %v43
    %705 = vmatmul.f32.gmra.mxu0 %v684
    %v706 = vpop.f32.mrf.mxu0
    %v707 = vadd.f32 %v681, %v706
    %708 = vmatmul.f32.gmra.mxu0 %v687
    %v709 = vpop.f32.mrf.mxu0
    %v710 = vadd.f32 %v681, %v709
    %711 = vdwg.mxu0
    %v712 = vadd.f32 %v647, %v707
    %v713 = vadd.f32 %v648, %v710
    %v714 = vsel %vm53, %v712, 0.0
    %715 = vadd.xlane.f32.xlu0 %v714
    %v716 = vpop.xlane.xlu0 %715
    %v717 = vsel %vm53, %v713, 0.0
    %718 = vadd.xlane.f32.xlu0 %v717
    %v719 = vpop.xlane.xlu0 %718
    %v720 = vmul.f32 %v716, %v604
    %v721 = vmul.f32 %v719, %v604
    %v722 = vsub.f32 %v712, %v720
    %v723 = vsub.f32 %v713, %v721
    %v724 = vmul.f32 %v722, %v722
    %v725 = vmul.f32 %v723, %v723
    %v726 = vsel %vm53, %v724, 0.0
    %727 = vadd.xlane.f32.xlu0 %v726
    %v728 = vpop.xlane.xlu0 %727
    %v729 = vsel %vm53, %v725, 0.0
    %730 = vadd.xlane.f32.xlu0 %v729
    %v731 = vpop.xlane.xlu0 %730
    %v732 = vmul.f32 %v728, %v604
    %v733 = vmul.f32 %v731, %v604
    %v734 = vadd.f32 %v732, 1e-05
    %v735 = vadd.f32 %v733, 1e-05
    %v736 = vrsqrt.pop %v734
    %v737 = vmul.f32 %v736, %v734
    %v738 = vmul.f32 %v737, %v736
    %v739 = vmul.f32 0.5, %v738
    %v740 = vsub.f32 1.5, %v739
    %v741 = vmul.f32 %v736, %v740
    %vm742 = vweird.f32 %v734
    %vm743 = vweird.f32 %v736
    %vm744 = vmor %vm742, %vm743
    %v745 = vsel %vm744, %v736, %v741
    %v746 = vrsqrt.pop %v735
    %v747 = vmul.f32 %v746, %v735
    %v748 = vmul.f32 %v747, %v746
    %v749 = vmul.f32 0.5, %v748
    %v750 = vsub.f32 1.5, %v749
    %v751 = vmul.f32 %v746, %v750
    %vm752 = vweird.f32 %v735
    %vm753 = vweird.f32 %v746
    %vm754 = vmor %vm752, %vm753
    %v755 = vsel %vm754, %v746, %v751
    %v756 = vmul.f32 %v722, %v745
    %v757 = vmul.f32 %v723, %v755
    %v758 = vperm.slane %v51, 6
    %v759 = vmul.f32 %v756, %v758
    %v760 = vmul.f32 %v757, %v758
    %v761 = vperm.slane %v51, 7
    %v762 = vadd.f32 %v759, %v761
    %v763 = vadd.f32 %v760, %v761
    %s764 = scalar_lea.vmem %s2, 32
    %v765 = vld [vmem:[%s764] sm:$0xff]
    %v766 = vld [vmem:[%s764 + $0x8] sm:$0xff]
    %v767 = vld [vmem:[%s764 + $0x10] sm:$0xff]
    %v768 = vld [vmem:[%s764 + $0x18] sm:$0xff]
    %s769 = scalar_lea.vmem %s3, 32
    %v770 = vld [vmem:[%s769] sm:$0xff]
    %v771 = vld [vmem:[%s769 + $0x8] sm:$0xff]
    %v772 = vld [vmem:[%s769 + $0x10] sm:$0xff]
    %v773 = vld [vmem:[%s769 + $0x18] sm:$0xff]
    %s774 = scalar_lea.vmem %s4, 32
    %v775 = vld [vmem:[%s774] sm:$0xff]
    %v776 = vld [vmem:[%s774 + $0x8] sm:$0xff]
    %v777 = vld [vmem:[%s774 + $0x10] sm:$0xff]
    %v778 = vld [vmem:[%s774 + $0x18] sm:$0xff]
    %s779 = scalar_lea.vmem %s5, 64
    %v780 = vld [vmem:[%s779] sm:$0xff]
    %v781 = vld [vmem:[%s779 + $0x8] sm:$0xff]
    %v782 = vld [vmem:[%s779 + $0x10] sm:$0xff]
    %v783 = vld [vmem:[%s779 + $0x18] sm:$0xff]
    %v784 = vld [vmem:[%s779 + $0x20] sm:$0xff]
    %v785 = vld [vmem:[%s779 + $0x28] sm:$0xff]
    %v786 = vld [vmem:[%s779 + $0x30] sm:$0xff]
    %v787 = vld [vmem:[%s779 + $0x38] sm:$0xff]
    %s788 = scalar_lea.vmem %s6, 8
    %v789 = vld [vmem:[%s788] sm:$0xff]
    %v790 = vperm.slane %v789, 0
    %v792 = vsel %vm53, %v762, 0
    %v795 = vsel %vm53, %v763, 0
    %797 = vmatpush.msra.mxu0 0.0
    %798 = vmatpush.msra.mxu0 0.0
    %799 = vmatpush.msra.mxu0 0.0
    %800 = vmatpush.msra.mxu0 0.0
    %801 = vmatpush.msra.mxu0 0.0
    %802 = vmatpush.msra.mxu0 0.0
    %803 = vmatpush.msra.mxu0 0.0
    %804 = vmatpush.msra.mxu0 0.0
    %805 = vmatpush.msra.mxu0 0.0
    %806 = vmatpush.msra.mxu0 0.0
    %807 = vmatpush.msra.mxu0 0.0
    %808 = vmatpush.msra.mxu0 0.0
    %809 = vmatpush.msra.mxu0 %v768
    %810 = vmatpush.msra.mxu0 %v767
    %811 = vmatpush.msra.mxu0 %v766
    %812 = vmatpush.msra.mxu0 %v765
    %813 = vmatmul.f32.gmra.mxu0 %v792
    %v814 = vpop.f32.mrf.mxu0
    %v815 = vadd.f32 %v790, %v814
    %816 = vmatmul.f32.gmra.mxu0 %v795
    %v817 = vpop.f32.mrf.mxu0
    %v818 = vadd.f32 %v790, %v817
    %819 = vdwg.mxu0
    %822 = vrot.lane.b32.xlu0 %v815, 96
    %v823 = vpop.permute.xlu0 %822
    %824 = vrot.lane.b32.xlu0 %v818, 96
    %v825 = vpop.permute.xlu0 %824
    %v826 = vsel %vm89, %v815, 0
    %v828 = vsel %vm89, %v818, 0
    %v830 = vsel %vm89, %v823, 0
    %v832 = vsel %vm89, %v825, 0
    %834 = vmatpush.xpose.msra.mxu0 0.0
    %835 = vmatpush.xpose.msra.mxu0 0.0
    %836 = vmatpush.xpose.msra.mxu0 0.0
    %837 = vmatpush.xpose.msra.mxu0 0.0
    %838 = vmatpush.xpose.msra.mxu0 0.0
    %839 = vmatpush.xpose.msra.mxu0 0.0
    %840 = vmatpush.xpose.msra.mxu0 0.0
    %841 = vmatpush.xpose.msra.mxu0 0.0
    %842 = vmatpush.xpose.msra.mxu0 0.0
    %843 = vmatpush.xpose.msra.mxu0 0.0
    %844 = vmatpush.xpose.msra.mxu0 0.0
    %845 = vmatpush.xpose.msra.mxu0 0.0
    %846 = vmatpush.xpose.msra.mxu0 0.0
    %847 = vmatpush.xpose.msra.mxu0 0.0
    %848 = vmatpush.xpose.msra.mxu0 %v832
    %849 = vmatpush.xpose.msra.mxu0 %v830
    %850 = vmatmul.f32.gmra.mxu0 %v826
    %v851 = vpop.f32.mrf.mxu0
    %v852 = vadd.f32 %v29, %v851
    %853 = vmatmul.f32.gmra.mxu0 %v828
    %v854 = vpop.f32.mrf.mxu0
    %v855 = vadd.f32 %v30, %v854
    %856 = vdwg.mxu0
    %v857 = vsel %vm121, %v852, -inf
    %858 = vmax.xlane.f32.xlu0 %v857
    %v859 = vpop.xlane.xlu0 %858
    %v860 = vsel %vm121, %v855, -inf
    %861 = vmax.xlane.f32.xlu0 %v860
    %v862 = vpop.xlane.xlu0 %861
    %v863 = vsub.f32 %v852, %v859
    %v864 = vsub.f32 %v855, %v862
    %v865 = vmul.f32 %v863, 1.442695
    %v866 = vpow.pop %v865
    %v867 = vmul.f32 %v864, 1.442695
    %v868 = vpow.pop %v867
    %v869 = vsel %vm121, %v866, 0.0
    %870 = vadd.xlane.f32.xlu0 %v869
    %v871 = vpop.xlane.xlu0 %870
    %v872 = vsel %vm121, %v868, 0.0
    %873 = vadd.xlane.f32.xlu0 %v872
    %v874 = vpop.xlane.xlu0 %873
    %v875 = vrcp.pop %v871
    %v876 = vrcp.pop %v874
    %v877 = vmul.f32 %v866, %v875
    %v878 = vmul.f32 %v868, %v876
    %879 = vrot.lane.b32.xlu0 %v815, 64
    %v880 = vpop.permute.xlu0 %879
    %881 = vrot.lane.b32.xlu0 %v818, 64
    %v882 = vpop.permute.xlu0 %881
    %v886 = vsel %vm121, %v877, 0
    %v889 = vsel %vm121, %v878, 0
    %891 = vmatpush.msra.mxu0 0.0
    %892 = vmatpush.msra.mxu0 0.0
    %893 = vmatpush.msra.mxu0 0.0
    %894 = vmatpush.msra.mxu0 0.0
    %895 = vmatpush.msra.mxu0 0.0
    %896 = vmatpush.msra.mxu0 0.0
    %897 = vmatpush.msra.mxu0 0.0
    %898 = vmatpush.msra.mxu0 0.0
    %899 = vmatpush.msra.mxu0 0.0
    %900 = vmatpush.msra.mxu0 0.0
    %901 = vmatpush.msra.mxu0 0.0
    %902 = vmatpush.msra.mxu0 0.0
    %903 = vmatpush.msra.mxu0 0.0
    %904 = vmatpush.msra.mxu0 0.0
    %905 = vmatpush.msra.mxu0 %v882
    %906 = vmatpush.msra.mxu0 %v880
    %907 = vmatmul.f32.gmra.mxu0 %v886
    %v908 = vpop.f32.mrf.mxu0
    %v909 = vadd.f32 0.0, %v908
    %910 = vmatmul.f32.gmra.mxu0 %v889
    %v911 = vpop.f32.mrf.mxu0
    %v912 = vadd.f32 0.0, %v911
    %913 = vdwg.mxu0
    %914 = vrot.lane.b32.xlu0 %v815, 120
    %v915 = vpop.permute.xlu0 %914
    %916 = vrot.lane.b32.xlu0 %v818, 120
    %v917 = vpop.permute.xlu0 %916
    %918 = vrot.lane.b32.xlu0 %v815, 88
    %v919 = vpop.permute.xlu0 %918
    %920 = vrot.lane.b32.xlu0 %v818, 88
    %v921 = vpop.permute.xlu0 %920
    %v922 = vsel %vm89, %v915, 0
    %v924 = vsel %vm89, %v917, 0
    %v926 = vsel %vm89, %v919, 0
    %v928 = vsel %vm89, %v921, 0
    %930 = vmatpush.xpose.msra.mxu0 0.0
    %931 = vmatpush.xpose.msra.mxu0 0.0
    %932 = vmatpush.xpose.msra.mxu0 0.0
    %933 = vmatpush.xpose.msra.mxu0 0.0
    %934 = vmatpush.xpose.msra.mxu0 0.0
    %935 = vmatpush.xpose.msra.mxu0 0.0
    %936 = vmatpush.xpose.msra.mxu0 0.0
    %937 = vmatpush.xpose.msra.mxu0 0.0
    %938 = vmatpush.xpose.msra.mxu0 0.0
    %939 = vmatpush.xpose.msra.mxu0 0.0
    %940 = vmatpush.xpose.msra.mxu0 0.0
    %941 = vmatpush.xpose.msra.mxu0 0.0
    %942 = vmatpush.xpose.msra.mxu0 0.0
    %943 = vmatpush.xpose.msra.mxu0 0.0
    %944 = vmatpush.xpose.msra.mxu0 %v928
    %945 = vmatpush.xpose.msra.mxu0 %v926
    %946 = vmatmul.f32.gmra.mxu0 %v922
    %v947 = vpop.f32.mrf.mxu0
    %v948 = vadd.f32 %v29, %v947
    %949 = vmatmul.f32.gmra.mxu0 %v924
    %v950 = vpop.f32.mrf.mxu0
    %v951 = vadd.f32 %v30, %v950
    %952 = vdwg.mxu0
    %v953 = vsel %vm121, %v948, -inf
    %954 = vmax.xlane.f32.xlu0 %v953
    %v955 = vpop.xlane.xlu0 %954
    %v956 = vsel %vm121, %v951, -inf
    %957 = vmax.xlane.f32.xlu0 %v956
    %v958 = vpop.xlane.xlu0 %957
    %v959 = vsub.f32 %v948, %v955
    %v960 = vsub.f32 %v951, %v958
    %v961 = vmul.f32 %v959, 1.442695
    %v962 = vpow.pop %v961
    %v963 = vmul.f32 %v960, 1.442695
    %v964 = vpow.pop %v963
    %v965 = vsel %vm121, %v962, 0.0
    %966 = vadd.xlane.f32.xlu0 %v965
    %v967 = vpop.xlane.xlu0 %966
    %v968 = vsel %vm121, %v964, 0.0
    %969 = vadd.xlane.f32.xlu0 %v968
    %v970 = vpop.xlane.xlu0 %969
    %v971 = vrcp.pop %v967
    %v972 = vrcp.pop %v970
    %v973 = vmul.f32 %v962, %v971
    %v974 = vmul.f32 %v964, %v972
    %975 = vrot.lane.b32.xlu0 %v815, 56
    %v976 = vpop.permute.xlu0 %975
    %977 = vrot.lane.b32.xlu0 %v818, 56
    %v978 = vpop.permute.xlu0 %977
    %v982 = vsel %vm121, %v973, 0
    %v985 = vsel %vm121, %v974, 0
    %987 = vmatpush.msra.mxu0 0.0
    %988 = vmatpush.msra.mxu0 0.0
    %989 = vmatpush.msra.mxu0 0.0
    %990 = vmatpush.msra.mxu0 0.0
    %991 = vmatpush.msra.mxu0 0.0
    %992 = vmatpush.msra.mxu0 0.0
    %993 = vmatpush.msra.mxu0 0.0
    %994 = vmatpush.msra.mxu0 0.0
    %995 = vmatpush.msra.mxu0 0.0
    %996 = vmatpush.msra.mxu0 0.0
    %997 = vmatpush.msra.mxu0 0.0
    %998 = vmatpush.msra.mxu0 0.0
    %999 = vmatpush.msra.mxu0 0.0
    %1000 = vmatpush.msra.mxu0 0.0
    %1001 = vmatpush.msra.mxu0 %v978
    %1002 = vmatpush.msra.mxu0 %v976
    %1003 = vmatmul.f32.gmra.mxu0 %v982
    %v1004 = vpop.f32.mrf.mxu0
    %v1005 = vadd.f32 0.0, %v1004
    %1006 = vmatmul.f32.gmra.mxu0 %v985
    %v1007 = vpop.f32.mrf.mxu0
    %v1008 = vadd.f32 0.0, %v1007
    %1009 = vdwg.mxu0
    %v1011 = vsel %vm89, %v1005, 0
    %v1014 = vsel %vm89, %v1008, 0
    %1016 = vmatpush.msra.mxu0 0.0
    %1017 = vmatpush.msra.mxu0 0.0
    %1018 = vmatpush.msra.mxu0 0.0
    %1019 = vmatpush.msra.mxu0 0.0
    %1020 = vmatpush.msra.mxu0 0.0
    %1021 = vmatpush.msra.mxu0 0.0
    %1022 = vmatpush.msra.mxu0 0.0
    %1023 = vmatpush.msra.mxu0 0.0
    %1024 = vmatpush.msra.mxu0 0.0
    %1025 = vmatpush.msra.mxu0 0.0
    %1026 = vmatpush.msra.mxu0 0.0
    %1027 = vmatpush.msra.mxu0 0.0
    %1028 = vmatpush.msra.mxu0 0.0
    %1029 = vmatpush.msra.mxu0 0.0
    %1030 = vmatpush.msra.mxu0 0.0
    %1031 = vmatpush.msra.mxu0 %v771
    %1032 = vmatmul.f32.gmra.mxu0 %v1011
    %v1033 = vpop.f32.mrf.mxu0
    %v1034 = vadd.f32 0.0, %v1033
    %1035 = vmatmul.f32.gmra.mxu0 %v1014
    %v1036 = vpop.f32.mrf.mxu0
    %v1037 = vadd.f32 0.0, %v1036
    %1038 = vdwg.mxu0
    %v1040 = vsel %vm89, %v909, 0
    %v1043 = vsel %vm89, %v912, 0
    %1045 = vmatpush.msra.mxu0 0.0
    %1046 = vmatpush.msra.mxu0 0.0
    %1047 = vmatpush.msra.mxu0 0.0
    %1048 = vmatpush.msra.mxu0 0.0
    %1049 = vmatpush.msra.mxu0 0.0
    %1050 = vmatpush.msra.mxu0 0.0
    %1051 = vmatpush.msra.mxu0 0.0
    %1052 = vmatpush.msra.mxu0 0.0
    %1053 = vmatpush.msra.mxu0 0.0
    %1054 = vmatpush.msra.mxu0 0.0
    %1055 = vmatpush.msra.mxu0 0.0
    %1056 = vmatpush.msra.mxu0 0.0
    %1057 = vmatpush.msra.mxu0 0.0
    %1058 = vmatpush.msra.mxu0 0.0
    %1059 = vmatpush.msra.mxu0 0.0
    %1060 = vmatpush.msra.mxu0 %v770
    %1061 = vmatmul.f32.gmra.mxu0 %v1040
    %v1062 = vpop.f32.mrf.mxu0
    %v1063 = vadd.f32 %v1034, %v1062
    %1064 = vmatmul.f32.gmra.mxu0 %v1043
    %v1065 = vpop.f32.mrf.mxu0
    %v1066 = vadd.f32 %v1037, %v1065
    %1067 = vdwg.mxu0
    %1068 = vrot.lane.b32.xlu0 %v815, 112
    %v1069 = vpop.permute.xlu0 %1068
    %1070 = vrot.lane.b32.xlu0 %v818, 112
    %v1071 = vpop.permute.xlu0 %1070
    %1072 = vrot.lane.b32.xlu0 %v815, 80
    %v1073 = vpop.permute.xlu0 %1072
    %1074 = vrot.lane.b32.xlu0 %v818, 80
    %v1075 = vpop.permute.xlu0 %1074
    %v1076 = vsel %vm89, %v1069, 0
    %v1078 = vsel %vm89, %v1071, 0
    %v1080 = vsel %vm89, %v1073, 0
    %v1082 = vsel %vm89, %v1075, 0
    %1084 = vmatpush.xpose.msra.mxu0 0.0
    %1085 = vmatpush.xpose.msra.mxu0 0.0
    %1086 = vmatpush.xpose.msra.mxu0 0.0
    %1087 = vmatpush.xpose.msra.mxu0 0.0
    %1088 = vmatpush.xpose.msra.mxu0 0.0
    %1089 = vmatpush.xpose.msra.mxu0 0.0
    %1090 = vmatpush.xpose.msra.mxu0 0.0
    %1091 = vmatpush.xpose.msra.mxu0 0.0
    %1092 = vmatpush.xpose.msra.mxu0 0.0
    %1093 = vmatpush.xpose.msra.mxu0 0.0
    %1094 = vmatpush.xpose.msra.mxu0 0.0
    %1095 = vmatpush.xpose.msra.mxu0 0.0
    %1096 = vmatpush.xpose.msra.mxu0 0.0
    %1097 = vmatpush.xpose.msra.mxu0 0.0
    %1098 = vmatpush.xpose.msra.mxu0 %v1082
    %1099 = vmatpush.xpose.msra.mxu0 %v1080
    %1100 = vmatmul.f32.gmra.mxu0 %v1076
    %v1101 = vpop.f32.mrf.mxu0
    %v1102 = vadd.f32 %v29, %v1101
    %1103 = vmatmul.f32.gmra.mxu0 %v1078
    %v1104 = vpop.f32.mrf.mxu0
    %v1105 = vadd.f32 %v30, %v1104
    %1106 = vdwg.mxu0
    %v1107 = vsel %vm121, %v1102, -inf
    %1108 = vmax.xlane.f32.xlu0 %v1107
    %v1109 = vpop.xlane.xlu0 %1108
    %v1110 = vsel %vm121, %v1105, -inf
    %1111 = vmax.xlane.f32.xlu0 %v1110
    %v1112 = vpop.xlane.xlu0 %1111
    %v1113 = vsub.f32 %v1102, %v1109
    %v1114 = vsub.f32 %v1105, %v1112
    %v1115 = vmul.f32 %v1113, 1.442695
    %v1116 = vpow.pop %v1115
    %v1117 = vmul.f32 %v1114, 1.442695
    %v1118 = vpow.pop %v1117
    %v1119 = vsel %vm121, %v1116, 0.0
    %1120 = vadd.xlane.f32.xlu0 %v1119
    %v1121 = vpop.xlane.xlu0 %1120
    %v1122 = vsel %vm121, %v1118, 0.0
    %1123 = vadd.xlane.f32.xlu0 %v1122
    %v1124 = vpop.xlane.xlu0 %1123
    %v1125 = vrcp.pop %v1121
    %v1126 = vrcp.pop %v1124
    %v1127 = vmul.f32 %v1116, %v1125
    %v1128 = vmul.f32 %v1118, %v1126
    %1129 = vrot.lane.b32.xlu0 %v815, 48
    %v1130 = vpop.permute.xlu0 %1129
    %1131 = vrot.lane.b32.xlu0 %v818, 48
    %v1132 = vpop.permute.xlu0 %1131
    %v1136 = vsel %vm121, %v1127, 0
    %v1139 = vsel %vm121, %v1128, 0
    %1141 = vmatpush.msra.mxu0 0.0
    %1142 = vmatpush.msra.mxu0 0.0
    %1143 = vmatpush.msra.mxu0 0.0
    %1144 = vmatpush.msra.mxu0 0.0
    %1145 = vmatpush.msra.mxu0 0.0
    %1146 = vmatpush.msra.mxu0 0.0
    %1147 = vmatpush.msra.mxu0 0.0
    %1148 = vmatpush.msra.mxu0 0.0
    %1149 = vmatpush.msra.mxu0 0.0
    %1150 = vmatpush.msra.mxu0 0.0
    %1151 = vmatpush.msra.mxu0 0.0
    %1152 = vmatpush.msra.mxu0 0.0
    %1153 = vmatpush.msra.mxu0 0.0
    %1154 = vmatpush.msra.mxu0 0.0
    %1155 = vmatpush.msra.mxu0 %v1132
    %1156 = vmatpush.msra.mxu0 %v1130
    %1157 = vmatmul.f32.gmra.mxu0 %v1136
    %v1158 = vpop.f32.mrf.mxu0
    %v1159 = vadd.f32 0.0, %v1158
    %1160 = vmatmul.f32.gmra.mxu0 %v1139
    %v1161 = vpop.f32.mrf.mxu0
    %v1162 = vadd.f32 0.0, %v1161
    %1163 = vdwg.mxu0
    %v1165 = vsel %vm89, %v1159, 0
    %v1168 = vsel %vm89, %v1162, 0
    %1170 = vmatpush.msra.mxu0 0.0
    %1171 = vmatpush.msra.mxu0 0.0
    %1172 = vmatpush.msra.mxu0 0.0
    %1173 = vmatpush.msra.mxu0 0.0
    %1174 = vmatpush.msra.mxu0 0.0
    %1175 = vmatpush.msra.mxu0 0.0
    %1176 = vmatpush.msra.mxu0 0.0
    %1177 = vmatpush.msra.mxu0 0.0
    %1178 = vmatpush.msra.mxu0 0.0
    %1179 = vmatpush.msra.mxu0 0.0
    %1180 = vmatpush.msra.mxu0 0.0
    %1181 = vmatpush.msra.mxu0 0.0
    %1182 = vmatpush.msra.mxu0 0.0
    %1183 = vmatpush.msra.mxu0 0.0
    %1184 = vmatpush.msra.mxu0 0.0
    %1185 = vmatpush.msra.mxu0 %v772
    %1186 = vmatmul.f32.gmra.mxu0 %v1165
    %v1187 = vpop.f32.mrf.mxu0
    %v1188 = vadd.f32 0.0, %v1187
    %1189 = vmatmul.f32.gmra.mxu0 %v1168
    %v1190 = vpop.f32.mrf.mxu0
    %v1191 = vadd.f32 0.0, %v1190
    %1192 = vdwg.mxu0
    %v1193 = vadd.f32 %v1063, %v1188
    %v1194 = vadd.f32 %v1066, %v1191
    %1195 = vrot.lane.b32.xlu0 %v815, 104
    %v1196 = vpop.permute.xlu0 %1195
    %1197 = vrot.lane.b32.xlu0 %v818, 104
    %v1198 = vpop.permute.xlu0 %1197
    %1199 = vrot.lane.b32.xlu0 %v815, 72
    %v1200 = vpop.permute.xlu0 %1199
    %1201 = vrot.lane.b32.xlu0 %v818, 72
    %v1202 = vpop.permute.xlu0 %1201
    %v1203 = vsel %vm89, %v1196, 0
    %v1205 = vsel %vm89, %v1198, 0
    %v1207 = vsel %vm89, %v1200, 0
    %v1209 = vsel %vm89, %v1202, 0
    %1211 = vmatpush.xpose.msra.mxu0 0.0
    %1212 = vmatpush.xpose.msra.mxu0 0.0
    %1213 = vmatpush.xpose.msra.mxu0 0.0
    %1214 = vmatpush.xpose.msra.mxu0 0.0
    %1215 = vmatpush.xpose.msra.mxu0 0.0
    %1216 = vmatpush.xpose.msra.mxu0 0.0
    %1217 = vmatpush.xpose.msra.mxu0 0.0
    %1218 = vmatpush.xpose.msra.mxu0 0.0
    %1219 = vmatpush.xpose.msra.mxu0 0.0
    %1220 = vmatpush.xpose.msra.mxu0 0.0
    %1221 = vmatpush.xpose.msra.mxu0 0.0
    %1222 = vmatpush.xpose.msra.mxu0 0.0
    %1223 = vmatpush.xpose.msra.mxu0 0.0
    %1224 = vmatpush.xpose.msra.mxu0 0.0
    %1225 = vmatpush.xpose.msra.mxu0 %v1209
    %1226 = vmatpush.xpose.msra.mxu0 %v1207
    %1227 = vmatmul.f32.gmra.mxu0 %v1203
    %v1228 = vpop.f32.mrf.mxu0
    %v1229 = vadd.f32 %v29, %v1228
    %1230 = vmatmul.f32.gmra.mxu0 %v1205
    %v1231 = vpop.f32.mrf.mxu0
    %v1232 = vadd.f32 %v30, %v1231
    %1233 = vdwg.mxu0
    %v1234 = vsel %vm121, %v1229, -inf
    %1235 = vmax.xlane.f32.xlu0 %v1234
    %v1236 = vpop.xlane.xlu0 %1235
    %v1237 = vsel %vm121, %v1232, -inf
    %1238 = vmax.xlane.f32.xlu0 %v1237
    %v1239 = vpop.xlane.xlu0 %1238
    %v1240 = vsub.f32 %v1229, %v1236
    %v1241 = vsub.f32 %v1232, %v1239
    %v1242 = vmul.f32 %v1240, 1.442695
    %v1243 = vpow.pop %v1242
    %v1244 = vmul.f32 %v1241, 1.442695
    %v1245 = vpow.pop %v1244
    %v1246 = vsel %vm121, %v1243, 0.0
    %1247 = vadd.xlane.f32.xlu0 %v1246
    %v1248 = vpop.xlane.xlu0 %1247
    %v1249 = vsel %vm121, %v1245, 0.0
    %1250 = vadd.xlane.f32.xlu0 %v1249
    %v1251 = vpop.xlane.xlu0 %1250
    %v1252 = vrcp.pop %v1248
    %v1253 = vrcp.pop %v1251
    %v1254 = vmul.f32 %v1243, %v1252
    %v1255 = vmul.f32 %v1245, %v1253
    %1256 = vrot.lane.b32.xlu0 %v815, 40
    %v1257 = vpop.permute.xlu0 %1256
    %1258 = vrot.lane.b32.xlu0 %v818, 40
    %v1259 = vpop.permute.xlu0 %1258
    %v1263 = vsel %vm121, %v1254, 0
    %v1266 = vsel %vm121, %v1255, 0
    %1268 = vmatpush.msra.mxu0 0.0
    %1269 = vmatpush.msra.mxu0 0.0
    %1270 = vmatpush.msra.mxu0 0.0
    %1271 = vmatpush.msra.mxu0 0.0
    %1272 = vmatpush.msra.mxu0 0.0
    %1273 = vmatpush.msra.mxu0 0.0
    %1274 = vmatpush.msra.mxu0 0.0
    %1275 = vmatpush.msra.mxu0 0.0
    %1276 = vmatpush.msra.mxu0 0.0
    %1277 = vmatpush.msra.mxu0 0.0
    %1278 = vmatpush.msra.mxu0 0.0
    %1279 = vmatpush.msra.mxu0 0.0
    %1280 = vmatpush.msra.mxu0 0.0
    %1281 = vmatpush.msra.mxu0 0.0
    %1282 = vmatpush.msra.mxu0 %v1259
    %1283 = vmatpush.msra.mxu0 %v1257
    %1284 = vmatmul.f32.gmra.mxu0 %v1263
    %v1285 = vpop.f32.mrf.mxu0
    %v1286 = vadd.f32 0.0, %v1285
    %1287 = vmatmul.f32.gmra.mxu0 %v1266
    %v1288 = vpop.f32.mrf.mxu0
    %v1289 = vadd.f32 0.0, %v1288
    %1290 = vdwg.mxu0
    %v1292 = vsel %vm89, %v1286, 0
    %v1295 = vsel %vm89, %v1289, 0
    %1297 = vmatpush.msra.mxu0 0.0
    %1298 = vmatpush.msra.mxu0 0.0
    %1299 = vmatpush.msra.mxu0 0.0
    %1300 = vmatpush.msra.mxu0 0.0
    %1301 = vmatpush.msra.mxu0 0.0
    %1302 = vmatpush.msra.mxu0 0.0
    %1303 = vmatpush.msra.mxu0 0.0
    %1304 = vmatpush.msra.mxu0 0.0
    %1305 = vmatpush.msra.mxu0 0.0
    %1306 = vmatpush.msra.mxu0 0.0
    %1307 = vmatpush.msra.mxu0 0.0
    %1308 = vmatpush.msra.mxu0 0.0
    %1309 = vmatpush.msra.mxu0 0.0
    %1310 = vmatpush.msra.mxu0 0.0
    %1311 = vmatpush.msra.mxu0 0.0
    %1312 = vmatpush.msra.mxu0 %v773
    %1313 = vmatmul.f32.gmra.mxu0 %v1292
    %v1314 = vpop.f32.mrf.mxu0
    %v1315 = vadd.f32 0.0, %v1314
    %1316 = vmatmul.f32.gmra.mxu0 %v1295
    %v1317 = vpop.f32.mrf.mxu0
    %v1318 = vadd.f32 0.0, %v1317
    %1319 = vdwg.mxu0
    %v1320 = vadd.f32 %v1193, %v1315
    %v1321 = vadd.f32 %v1194, %v1318
    %v1322 = vperm.slane %v789, 1
    %v1323 = vadd.f32 %v1320, %v1322
    %v1324 = vadd.f32 %v1321, %v1322
    %v1325 = vadd.f32 %v762, %v1323
    %v1326 = vadd.f32 %v763, %v1324
    %v1327 = vsel %vm53, %v1325, 0.0
    %1328 = vadd.xlane.f32.xlu0 %v1327
    %v1329 = vpop.xlane.xlu0 %1328
    %v1330 = vsel %vm53, %v1326, 0.0
    %1331 = vadd.xlane.f32.xlu0 %v1330
    %v1332 = vpop.xlane.xlu0 %1331
    %v1333 = vmul.f32 %v1329, %v604
    %v1334 = vmul.f32 %v1332, %v604
    %v1335 = vsub.f32 %v1325, %v1333
    %v1336 = vsub.f32 %v1326, %v1334
    %v1337 = vmul.f32 %v1335, %v1335
    %v1338 = vmul.f32 %v1336, %v1336
    %v1339 = vsel %vm53, %v1337, 0.0
    %1340 = vadd.xlane.f32.xlu0 %v1339
    %v1341 = vpop.xlane.xlu0 %1340
    %v1342 = vsel %vm53, %v1338, 0.0
    %1343 = vadd.xlane.f32.xlu0 %v1342
    %v1344 = vpop.xlane.xlu0 %1343
    %v1345 = vmul.f32 %v1341, %v604
    %v1346 = vmul.f32 %v1344, %v604
    %v1347 = vadd.f32 %v1345, 1e-05
    %v1348 = vadd.f32 %v1346, 1e-05
    %v1349 = vrsqrt.pop %v1347
    %v1350 = vmul.f32 %v1349, %v1347
    %v1351 = vmul.f32 %v1350, %v1349
    %v1352 = vmul.f32 0.5, %v1351
    %v1353 = vsub.f32 1.5, %v1352
    %v1354 = vmul.f32 %v1349, %v1353
    %vm1355 = vweird.f32 %v1347
    %vm1356 = vweird.f32 %v1349
    %vm1357 = vmor %vm1355, %vm1356
    %v1358 = vsel %vm1357, %v1349, %v1354
    %v1359 = vrsqrt.pop %v1348
    %v1360 = vmul.f32 %v1359, %v1348
    %v1361 = vmul.f32 %v1360, %v1359
    %v1362 = vmul.f32 0.5, %v1361
    %v1363 = vsub.f32 1.5, %v1362
    %v1364 = vmul.f32 %v1359, %v1363
    %vm1365 = vweird.f32 %v1348
    %vm1366 = vweird.f32 %v1359
    %vm1367 = vmor %vm1365, %vm1366
    %v1368 = vsel %vm1367, %v1359, %v1364
    %v1369 = vmul.f32 %v1335, %v1358
    %v1370 = vmul.f32 %v1336, %v1368
    %v1371 = vperm.slane %v789, 2
    %v1372 = vmul.f32 %v1369, %v1371
    %v1373 = vmul.f32 %v1370, %v1371
    %v1374 = vperm.slane %v789, 3
    %v1375 = vadd.f32 %v1372, %v1374
    %v1376 = vadd.f32 %v1373, %v1374
    %v1377 = vperm.slane %v789, 4
    %v1379 = vsel %vm53, %v1375, 0
    %v1382 = vsel %vm53, %v1376, 0
    %1384 = vmatpush.msra.mxu0 0.0
    %1385 = vmatpush.msra.mxu0 0.0
    %1386 = vmatpush.msra.mxu0 0.0
    %1387 = vmatpush.msra.mxu0 0.0
    %1388 = vmatpush.msra.mxu0 0.0
    %1389 = vmatpush.msra.mxu0 0.0
    %1390 = vmatpush.msra.mxu0 0.0
    %1391 = vmatpush.msra.mxu0 0.0
    %1392 = vmatpush.msra.mxu0 0.0
    %1393 = vmatpush.msra.mxu0 0.0
    %1394 = vmatpush.msra.mxu0 0.0
    %1395 = vmatpush.msra.mxu0 0.0
    %1396 = vmatpush.msra.mxu0 %v778
    %1397 = vmatpush.msra.mxu0 %v777
    %1398 = vmatpush.msra.mxu0 %v776
    %1399 = vmatpush.msra.mxu0 %v775
    %1400 = vmatmul.f32.gmra.mxu0 %v1379
    %v1401 = vpop.f32.mrf.mxu0
    %v1402 = vadd.f32 %v1377, %v1401
    %1403 = vmatmul.f32.gmra.mxu0 %v1382
    %v1404 = vpop.f32.mrf.mxu0
    %v1405 = vadd.f32 %v1377, %v1404
    %1406 = vdwg.mxu0
    %v1407 = vmax.f32 %v1402, 0.0
    %v1408 = vmax.f32 %v1405, 0.0
    %v1409 = vperm.slane %v789, 5
    %v1411 = vsel %vm682, %v1407, 0
    %v1414 = vsel %vm682, %v1408, 0
    %1416 = vmatpush.msra.mxu0 0.0
    %1417 = vmatpush.msra.mxu0 0.0
    %1418 = vmatpush.msra.mxu0 0.0
    %1419 = vmatpush.msra.mxu0 0.0
    %1420 = vmatpush.msra.mxu0 0.0
    %1421 = vmatpush.msra.mxu0 0.0
    %1422 = vmatpush.msra.mxu0 0.0
    %1423 = vmatpush.msra.mxu0 0.0
    %1424 = vmatpush.msra.mxu0 %v787
    %1425 = vmatpush.msra.mxu0 %v786
    %1426 = vmatpush.msra.mxu0 %v785
    %1427 = vmatpush.msra.mxu0 %v784
    %1428 = vmatpush.msra.mxu0 %v783
    %1429 = vmatpush.msra.mxu0 %v782
    %1430 = vmatpush.msra.mxu0 %v781
    %1431 = vmatpush.msra.mxu0 %v780
    %1432 = vmatmul.f32.gmra.mxu0 %v1411
    %v1433 = vpop.f32.mrf.mxu0
    %v1434 = vadd.f32 %v1409, %v1433
    %1435 = vmatmul.f32.gmra.mxu0 %v1414
    %v1436 = vpop.f32.mrf.mxu0
    %v1437 = vadd.f32 %v1409, %v1436
    %1438 = vdwg.mxu0
    %v1439 = vadd.f32 %v1375, %v1434
    %v1440 = vadd.f32 %v1376, %v1437
    %v1441 = vsel %vm53, %v1439, 0.0
    %1442 = vadd.xlane.f32.xlu0 %v1441
    %v1443 = vpop.xlane.xlu0 %1442
    %v1444 = vsel %vm53, %v1440, 0.0
    %1445 = vadd.xlane.f32.xlu0 %v1444
    %v1446 = vpop.xlane.xlu0 %1445
    %v1447 = vmul.f32 %v1443, %v604
    %v1448 = vmul.f32 %v1446, %v604
    %v1449 = vsub.f32 %v1439, %v1447
    %v1450 = vsub.f32 %v1440, %v1448
    %v1451 = vmul.f32 %v1449, %v1449
    %v1452 = vmul.f32 %v1450, %v1450
    %v1453 = vsel %vm53, %v1451, 0.0
    %1454 = vadd.xlane.f32.xlu0 %v1453
    %v1455 = vpop.xlane.xlu0 %1454
    %v1456 = vsel %vm53, %v1452, 0.0
    %1457 = vadd.xlane.f32.xlu0 %v1456
    %v1458 = vpop.xlane.xlu0 %1457
    %v1459 = vmul.f32 %v1455, %v604
    %v1460 = vmul.f32 %v1458, %v604
    %v1461 = vadd.f32 %v1459, 1e-05
    %v1462 = vadd.f32 %v1460, 1e-05
    %v1463 = vrsqrt.pop %v1461
    %v1464 = vmul.f32 %v1463, %v1461
    %v1465 = vmul.f32 %v1464, %v1463
    %v1466 = vmul.f32 0.5, %v1465
    %v1467 = vsub.f32 1.5, %v1466
    %v1468 = vmul.f32 %v1463, %v1467
    %vm1469 = vweird.f32 %v1461
    %vm1470 = vweird.f32 %v1463
    %vm1471 = vmor %vm1469, %vm1470
    %v1472 = vsel %vm1471, %v1463, %v1468
    %v1473 = vrsqrt.pop %v1462
    %v1474 = vmul.f32 %v1473, %v1462
    %v1475 = vmul.f32 %v1474, %v1473
    %v1476 = vmul.f32 0.5, %v1475
    %v1477 = vsub.f32 1.5, %v1476
    %v1478 = vmul.f32 %v1473, %v1477
    %vm1479 = vweird.f32 %v1462
    %vm1480 = vweird.f32 %v1473
    %vm1481 = vmor %vm1479, %vm1480
    %v1482 = vsel %vm1481, %v1473, %v1478
    %v1483 = vmul.f32 %v1449, %v1472
    %v1484 = vmul.f32 %v1450, %v1482
    %v1485 = vperm.slane %v789, 6
    %v1486 = vmul.f32 %v1483, %v1485
    %v1487 = vmul.f32 %v1484, %v1485
    %v1488 = vperm.slane %v789, 7
    %v1489 = vadd.f32 %v1486, %v1488
    %v1490 = vadd.f32 %v1487, %v1488
    %1491 = vst.msk [vmem:[#allocation2] sm:$0xff] %vm53, %v1489
    %1492 = vst.msk [vmem:[#allocation2 + $0x8] sm:$0xff] %vm53, %v1490
    // Predicated region
    $region30: #{encoder_forward.1} parent=1 // pred_check
      _
    $region31: #{encoder_forward.1} parent=1 // pred_check_branch
      %1494 = sbr.rel (0) target = $region33
    $region32: #{encoder_forward.1} parent=1 // pred_region
      %1496 = vsyncadd [#allocation3], 0
      %s1497 = sshll.u32 [#allocation2], 4
      %s1498 = int_to_ptr.vmem [resolvable:$true] %s1497
      %s1499 = sshll.u32 %s7, 4
      %s1500 = int_to_ptr.hbm [resolvable:$true] %s1499
      %1505 = dma.vmem_to_hbm [thread:$0]  %s1498, 256, %s1500, [#allocation3], 128, 128, 8
    $region33: #{encoder_forward.1} parent=1 // pred_fallthru
      _
    // Predicated region
    $region34: #{encoder_forward.1} parent=1 // pred_check
      _
    $region35: #{encoder_forward.1} parent=1 // pred_check_branch
      %1507 = sbr.rel (0) target = $region37
    $region36: #{encoder_forward.1} parent=1 // pred_region
      %1509 = dma.done [#allocation3], 256
    $region37: #{encoder_forward.1} parent=1 // pred_fallthru
      _
    %1510 = vsyncpa [#allocation3], 1

</llo_original>
